<compile_context>
chip_gen: v7x
topology: tpu7x:2x2x1
jax: 0.10.0
libtpu: 0.0.40
codegen_flags: <defaults>
</compile_context>

<pallas_src>
import functools

import jax
import jax.numpy as jnp
import numpy as np
from jax.experimental import pallas as pl
from jax.experimental.pallas import tpu as pltpu

SHAPE_DIM = 99                      # shape basis dimension (w_shape[:, 0:99])
EXP_DIM = 29                        # expression basis dimension (w_expression[:, 0:29])
PARAM_DIM = SHAPE_DIM + EXP_DIM     # 128 -- exact MXU K fit


def _bfmf_kernel(p_ref, cd_ref, w_ref, mu_ref, fv_ref, rot_ref, sc_ref):
    """One vertex tile: fused basis matmul + rotation + scale/translate.

    p_ref  : (B, 128)      concatenated [shape|exp] parameters, f32
    cd_ref : (B, 12)       camera-derived [R row-major (9), -|s|, tx, ty], f32
    w_ref  : (3, 128, TN)  fused [shape;exp] basis, coordinate-major, bf16
    mu_ref : (3, TN)       mean face, coordinate-major, f32
    fv_ref, rot_ref, sc_ref : (B, 3, TN) outputs, f32
    """
    p = p_ref[...].astype(jnp.bfloat16)        # bf16 x bf16 MXU operands, f32 accumulation
    cd = cd_ref[...]                           # (B, 12) f32

    # --- face_vertex per coordinate: one K=128 matmul on the MXU + mean add (VPU)
    v = []
    for c in range(3):
        vc = (jnp.dot(p, w_ref[c], preferred_element_type=jnp.float32)
              + mu_ref[c:c + 1, :])
        v.append(vc)
        fv_ref[:, c, :] = vc

    neg_s = cd[:, 9:10]                        # -|scale|, precomputed in wrapper

    # --- rotate, scale, translate (VPU, broadcast (B,1) * (B,TN)); R precomputed
    for c in range(3):
        rc = (cd[:, 3 * c:3 * c + 1] * v[0]
              + cd[:, 3 * c + 1:3 * c + 2] * v[1]
              + cd[:, 3 * c + 2:3 * c + 3] * v[2])
        rot_ref[:, c, :] = rc
        sc = neg_s * rc
        if c < 2:
            sc = sc + cd[:, 10 + c:11 + c]     # translation only on x / y rows
        sc_ref[:, c, :] = sc


def prepare_bfmf_buffers(w_shape, w_exp, mu):
    """One-time re-layout of the 3DMM assets (do this at model init, NOT per call).

    Returns:
      w_cat : (3, 128, N) bf16  fused [shape;exp] basis, coordinate-major
      mu_r  : (3, N)      f32   mean face, coordinate-major
    """
    three_n = mu.shape[0]
    N = three_n // 3
    ws = jnp.asarray(w_shape, jnp.float32).reshape(N, 3, SHAPE_DIM).transpose(1, 2, 0)
    we = jnp.asarray(w_exp, jnp.float32).reshape(N, 3, EXP_DIM).transpose(1, 2, 0)
    w_cat = jnp.concatenate([ws, we], axis=1).astype(jnp.bfloat16)   # (3, 128, N)
    mu_r = jnp.asarray(mu, jnp.float32).reshape(N, 3).T              # (3, N)
    return w_cat, mu_r


@functools.partial(jax.jit, static_argnames=("tile_n",))
def bfmf_batch_forward(shape_para, exp_para, camera_para, w_cat, mu_r, *, tile_n=1024):
    """Pallas-backed equivalent of BFMF_batch.forward.

    Args:
      shape_para  : (B, 99) f32
      exp_para    : (B, 29) f32
      camera_para : (B, 7)  f32  [quaternion(4), scale(1), translation(2)]
      w_cat       : (3, 128, N) bf16   from prepare_bfmf_buffers (built once)
      mu_r        : (3, N)      f32    from prepare_bfmf_buffers (built once)
    Returns (PyTorch layouts):
      face_vertex : (B, 3N)   interleaved [x0, y0, z0, ...]
      rotated     : (B, 3N)   coordinate-major [x0..xN-1, y0..yN-1, z0..zN-1]
      scaled      : (B, 3, N)
    """
    B = shape_para.shape[0]
    _, K, N = w_cat.shape
    assert K == PARAM_DIM
    assert N % tile_n == 0, "N must be a multiple of tile_n"

    # Fused parameter vector for the K=128 matmul.
    p = jnp.concatenate([shape_para, exp_para], axis=1)              # (B, 128)

    # Camera-derived quantities hoisted out of the per-tile loop.
    # Q2R_batch == normalized quaternion -> rotation matrix (row-major).
    q0, q1, q2, q3 = (camera_para[:, i] for i in range(4))
    inv_n = 1.0 / (q0 * q0 + q1 * q1 + q2 * q2 + q3 * q3)
    r = jnp.stack([
        q0 * q0 + q1 * q1 - q2 * q2 - q3 * q3,
        2.0 * (q1 * q2 - q0 * q3),
        2.0 * (q1 * q3 + q0 * q2),
        2.0 * (q1 * q2 + q0 * q3),
        q0 * q0 - q1 * q1 + q2 * q2 - q3 * q3,
        2.0 * (q2 * q3 - q0 * q1),
        2.0 * (q1 * q3 - q0 * q2),
        2.0 * (q2 * q3 + q0 * q1),
        q0 * q0 - q1 * q1 - q2 * q2 + q3 * q3,
    ], axis=-1) * inv_n[:, None]                                      # (B, 9)
    neg_s = -jnp.abs(camera_para[:, 4:5])                             # (B, 1)
    trans = camera_para[:, 5:7]                                       # (B, 2)
    cam_d = jnp.concatenate([r, neg_s, trans], axis=1)                # (B, 12)

    grid = (N // tile_n,)   # keep >= 2 parallel steps so both v7x TCs get work
    out_shape = tuple(jax.ShapeDtypeStruct((B, 3, N), jnp.float32) for _ in range(3))

    grid_spec = pltpu.PrefetchScalarGridSpec(
        num_scalar_prefetch=0,
        grid=grid,
        in_specs=[
            pl.BlockSpec((B, K), lambda i: (0, 0)),
            pl.BlockSpec((B, 12), lambda i: (0, 0)),
            pl.BlockSpec((3, K, tile_n), lambda i: (0, 0, i)),
            pl.BlockSpec((3, tile_n), lambda i: (0, i)),
        ],
        out_specs=[
            pl.BlockSpec((B, 3, tile_n), lambda i: (0, 0, i)),
            pl.BlockSpec((B, 3, tile_n), lambda i: (0, 0, i)),
            pl.BlockSpec((B, 3, tile_n), lambda i: (0, 0, i)),
        ],
    )

    fv, rot, sc = pl.pallas_call(
        _bfmf_kernel,
        out_shape=out_shape,
        grid_spec=grid_spec,
        compiler_params=pltpu.CompilerParams(
            dimension_semantics=("parallel",),
            vmem_limit_bytes=64 << 20),
    )(p, cam_d, w_cat, mu_r)

    # Glue back to PyTorch layouts: only face_vertex needs a transpose,
    # rotated is a free reshape of (B,3,N), scaled is returned as-is.
    face_vertex = fv.transpose(0, 2, 1).reshape(B, 3 * N)   # interleaved [x0,y0,z0,...]
    rotated = rot.reshape(B, 3 * N)                         # coordinate-major
    return face_vertex, rotated, sc


def _reference_forward(shape_para, exp_para, camera_para, w_shape, w_exp, mu):
    """Pure-JAX reference mirroring the PyTorch forward (for validation)."""
    B = shape_para.shape[0]
    hi = jax.lax.Precision.HIGHEST
    fv = mu[None, :] + (jnp.matmul(w_shape, shape_para.T, precision=hi)
                        + jnp.matmul(w_exp, exp_para.T, precision=hi)).T

    q0, q1, q2, q3 = (camera_para[:, i] for i in range(4))
    inv_n = 1.0 / (q0 * q0 + q1 * q1 + q2 * q2 + q3 * q3)
    R = jnp.stack([
        jnp.stack([(q0 * q0 + q1 * q1 - q2 * q2 - q3 * q3) * inv_n,
                   2.0 * (q1 * q2 - q0 * q3) * inv_n,
                   2.0 * (q1 * q3 + q0 * q2) * inv_n], axis=-1),
        jnp.stack([2.0 * (q1 * q2 + q0 * q3) * inv_n,
                   (q0 * q0 - q1 * q1 + q2 * q2 - q3 * q3) * inv_n,
                   2.0 * (q2 * q3 - q0 * q1) * inv_n], axis=-1),
        jnp.stack([2.0 * (q1 * q3 - q0 * q2) * inv_n,
                   2.0 * (q2 * q3 + q0 * q1) * inv_n,
                   (q0 * q0 - q1 * q1 - q2 * q2 + q3 * q3) * inv_n], axis=-1),
    ], axis=1)                                              # (B, 3, 3)

    V = fv.reshape(B, -1, 3).transpose(0, 2, 1)             # (B, 3, N)
    rotated = jnp.einsum("bij,bjn->bin", R, V, precision=hi).reshape(B, -1)
    scaled = (-jnp.abs(camera_para[:, 4:5]) * rotated).reshape(B, 3, -1)
    scaled = scaled.at[:, :2, :].add(camera_para[:, 5:7][:, :, None])
    return fv, rotated, scaled


if __name__ == "__main__":
    B = 2
    N = 2048            # vertices (small synthetic face model); grid = 2 parallel steps
    TILE_N = 1024

    key = jax.random.PRNGKey(0)
    k1, k2, k3, k4, k5, k6 = jax.random.split(key, 6)

    # Deterministic synthetic 3DMM "weights" (stand-ins for BFM/FaceWarehouse).
    w_shape = jax.random.normal(k1, (3 * N, SHAPE_DIM), dtype=jnp.float32) * 0.05
    w_exp = jax.random.normal(k2, (3 * N, EXP_DIM), dtype=jnp.float32) * 0.05
    mu = jax.random.normal(k3, (3 * N,), dtype=jnp.float32)

    # Inputs.
    shape_para = jax.random.normal(k4, (B, SHAPE_DIM), dtype=jnp.float32)
    exp_para = jax.random.normal(k5, (B, EXP_DIM), dtype=jnp.float32)
    camera_para = jax.random.normal(k6, (B, 7), dtype=jnp.float32)

    # One-time basis fusion + bf16 cast (outside the per-call jitted path).
    w_cat, mu_r = prepare_bfmf_buffers(w_shape, w_exp, mu)
    w_cat, mu_r = jax.device_put(w_cat), jax.device_put(mu_r)

    fv, rot, sc = bfmf_batch_forward(shape_para, exp_para, camera_para,
                                     w_cat, mu_r, tile_n=TILE_N)
    jax.block_until_ready((fv, rot, sc))

    # Validate against a reference computed on identically bf16-quantized MXU
    # operands (basis + params); everything else f32, so the comparison only
    # measures accumulation-order differences.
    bq = lambda x: x.astype(jnp.bfloat16).astype(jnp.float32)
    fv_ref, rot_ref, sc_ref = _reference_forward(
        bq(shape_para), bq(exp_para), camera_para, bq(w_shape), bq(w_exp), mu)

    np.testing.assert_allclose(np.asarray(fv), np.asarray(fv_ref),
                               rtol=1e-4, atol=2e-4)
    np.testing.assert_allclose(np.asarray(rot), np.asarray(rot_ref),
                               rtol=1e-4, atol=2e-4)
    np.testing.assert_allclose(np.asarray(sc), np.asarray(sc_ref),
                               rtol=1e-4, atol=2e-4)

    assert fv.shape == (B, 3 * N)
    assert rot.shape == (B, 3 * N)
    assert sc.shape == (B, 3, N)

    print("KERNEL_OK")
</pallas_src>

<mosaic_0001>
module attributes {stable_mosaic.version = 11 : i64} {
  func.func @_bfmf_kernel(%arg0: i32, %arg1: memref<2x128xf32, #tpu.memory_space<vmem>>, %arg2: memref<2x12xf32, #tpu.memory_space<vmem>>, %arg3: memref<3x128x1024xbf16, #tpu.memory_space<vmem>>, %arg4: memref<3x1024xf32, #tpu.memory_space<vmem>>, %arg5: memref<2x3x1024xf32, #tpu.memory_space<vmem>>, %arg6: memref<2x3x1024xf32, #tpu.memory_space<vmem>>, %arg7: memref<2x3x1024xf32, #tpu.memory_space<vmem>>) attributes {dimension_semantics = [#tpu.dimension_semantics<parallel>], iteration_bounds = array<i64: 2>, scalar_prefetch = 0 : i64, scratch_operands = 0 : i64, tpu.core_type = #tpu.core_type<tc>, window_params = [{pipeline_mode = #tpu.pipeline_mode<synchronous>, transform_indices = @transform_0, window_bounds = array<i64: 2, 128>}, {pipeline_mode = #tpu.pipeline_mode<synchronous>, transform_indices = @transform_1, window_bounds = array<i64: 2, 12>}, {transform_indices = @transform_2, window_bounds = array<i64: 3, 128, 1024>}, {transform_indices = @transform_3, window_bounds = array<i64: 3, 1024>}, {transform_indices = @transform_4, window_bounds = array<i64: 2, 3, 1024>}, {transform_indices = @transform_5, window_bounds = array<i64: 2, 3, 1024>}, {transform_indices = @transform_6, window_bounds = array<i64: 2, 3, 1024>}]} {
    %c0 = arith.constant 0 : index
    %c0_0 = arith.constant 0 : index
    %0 = vector.load %arg1[%c0, %c0_0] : memref<2x128xf32, #tpu.memory_space<vmem>>, vector<2x128xf32>
    %1 = arith.truncf %0 : vector<2x128xf32> to vector<2x128xbf16>
    %c0_1 = arith.constant 0 : index
    %c0_2 = arith.constant 0 : index
    %2 = vector.load %arg2[%c0_1, %c0_2] : memref<2x12xf32, #tpu.memory_space<vmem>>, vector<2x12xf32>
    %c0_3 = arith.constant 0 : index
    %c0_4 = arith.constant 0 : index
    %c0_5 = arith.constant 0 : index
    %3 = vector.load %arg3[%c0_3, %c0_4, %c0_5] : memref<3x128x1024xbf16, #tpu.memory_space<vmem>>, vector<1x128x1024xbf16>
    %4 = vector.shape_cast %3 : vector<1x128x1024xbf16> to vector<128x1024xbf16>
    %cst = arith.constant dense<0.000000e+00> : vector<2x1024xf32>
    %5 = tpu.matmul %1, %4, %cst {dimension_numbers = #tpu.dot_dimension_numbers<[1], [0], [0], [1], [0, 0, 1, 1], [], []>} : vector<2x128xbf16>, vector<128x1024xbf16>, vector<2x1024xf32> -> vector<2x1024xf32>
    %c0_6 = arith.constant 0 : index
    %c0_7 = arith.constant 0 : index
    %6 = vector.load %arg4[%c0_6, %c0_7] : memref<3x1024xf32, #tpu.memory_space<vmem>>, vector<1x1024xf32>
    %7 = vector.broadcast %6 : vector<1x1024xf32> to vector<2x1024xf32>
    %8 = arith.addf %5, %7 : vector<2x1024xf32>
    %c0_8 = arith.constant 0 : index
    %c0_9 = arith.constant 0 : index
    %c0_10 = arith.constant 0 : index
    %9 = vector.load %arg5[%c0_8, %c0_9, %c0_10] : memref<2x3x1024xf32, #tpu.memory_space<vmem>>, vector<2x1x1024xf32>
    %10 = vector.shape_cast %9 : vector<2x1x1024xf32> to vector<2x1024xf32>
    %11 = vector.shape_cast %8 : vector<2x1024xf32> to vector<2x1x1024xf32>
    tpu.vector_store %arg5[%c0_8, %c0_9, %c0_10], %11 {strides = array<i32>} : memref<2x3x1024xf32, #tpu.memory_space<vmem>>, vector<2x1x1024xf32>,
    %c1 = arith.constant 1 : index
    %c0_11 = arith.constant 0 : index
    %c0_12 = arith.constant 0 : index
    %12 = vector.load %arg3[%c1, %c0_11, %c0_12] : memref<3x128x1024xbf16, #tpu.memory_space<vmem>>, vector<1x128x1024xbf16>
    %13 = vector.shape_cast %12 : vector<1x128x1024xbf16> to vector<128x1024xbf16>
    %cst_13 = arith.constant dense<0.000000e+00> : vector<2x1024xf32>
    %14 = tpu.matmul %1, %13, %cst_13 {dimension_numbers = #tpu.dot_dimension_numbers<[1], [0], [0], [1], [0, 0, 1, 1], [], []>} : vector<2x128xbf16>, vector<128x1024xbf16>, vector<2x1024xf32> -> vector<2x1024xf32>
    %c1_14 = arith.constant 1 : index
    %c0_15 = arith.constant 0 : index
    %15 = vector.load %arg4[%c1_14, %c0_15] : memref<3x1024xf32, #tpu.memory_space<vmem>>, vector<1x1024xf32>
    %16 = vector.broadcast %15 : vector<1x1024xf32> to vector<2x1024xf32>
    %17 = arith.addf %14, %16 : vector<2x1024xf32>
    %c0_16 = arith.constant 0 : index
    %c1_17 = arith.constant 1 : index
    %c0_18 = arith.constant 0 : index
    %18 = vector.load %arg5[%c0_16, %c1_17, %c0_18] : memref<2x3x1024xf32, #tpu.memory_space<vmem>>, vector<2x1x1024xf32>
    %19 = vector.shape_cast %18 : vector<2x1x1024xf32> to vector<2x1024xf32>
    %20 = vector.shape_cast %17 : vector<2x1024xf32> to vector<2x1x1024xf32>
    tpu.vector_store %arg5[%c0_16, %c1_17, %c0_18], %20 {strides = array<i32>} : memref<2x3x1024xf32, #tpu.memory_space<vmem>>, vector<2x1x1024xf32>,
    %c2 = arith.constant 2 : index
    %c0_19 = arith.constant 0 : index
    %c0_20 = arith.constant 0 : index
    %21 = vector.load %arg3[%c2, %c0_19, %c0_20] : memref<3x128x1024xbf16, #tpu.memory_space<vmem>>, vector<1x128x1024xbf16>
    %22 = vector.shape_cast %21 : vector<1x128x1024xbf16> to vector<128x1024xbf16>
    %cst_21 = arith.constant dense<0.000000e+00> : vector<2x1024xf32>
    %23 = tpu.matmul %1, %22, %cst_21 {dimension_numbers = #tpu.dot_dimension_numbers<[1], [0], [0], [1], [0, 0, 1, 1], [], []>} : vector<2x128xbf16>, vector<128x1024xbf16>, vector<2x1024xf32> -> vector<2x1024xf32>
    %c2_22 = arith.constant 2 : index
    %c0_23 = arith.constant 0 : index
    %24 = vector.load %arg4[%c2_22, %c0_23] : memref<3x1024xf32, #tpu.memory_space<vmem>>, vector<1x1024xf32>
    %25 = vector.broadcast %24 : vector<1x1024xf32> to vector<2x1024xf32>
    %26 = arith.addf %23, %25 : vector<2x1024xf32>
    %c0_24 = arith.constant 0 : index
    %c2_25 = arith.constant 2 : index
    %c0_26 = arith.constant 0 : index
    %27 = vector.load %arg5[%c0_24, %c2_25, %c0_26] : memref<2x3x1024xf32, #tpu.memory_space<vmem>>, vector<2x1x1024xf32>
    %28 = vector.shape_cast %27 : vector<2x1x1024xf32> to vector<2x1024xf32>
    %29 = vector.shape_cast %26 : vector<2x1024xf32> to vector<2x1x1024xf32>
    tpu.vector_store %arg5[%c0_24, %c2_25, %c0_26], %29 {strides = array<i32>} : memref<2x3x1024xf32, #tpu.memory_space<vmem>>, vector<2x1x1024xf32>,
    %30 = vector.extract_strided_slice %2 {offsets = [0, 9], sizes = [2, 1], strides = [1, 1]} : vector<2x12xf32> to vector<2x1xf32>
    %31 = vector.extract_strided_slice %2 {offsets = [0, 0], sizes = [2, 1], strides = [1, 1]} : vector<2x12xf32> to vector<2x1xf32>
    %32 = vector.broadcast %31 : vector<2x1xf32> to vector<2x1024xf32>
    %33 = arith.mulf %32, %8 : vector<2x1024xf32>
    %34 = vector.extract_strided_slice %2 {offsets = [0, 1], sizes = [2, 1], strides = [1, 1]} : vector<2x12xf32> to vector<2x1xf32>
    %35 = vector.broadcast %34 : vector<2x1xf32> to vector<2x1024xf32>
    %36 = arith.mulf %35, %17 : vector<2x1024xf32>
    %37 = arith.addf %33, %36 : vector<2x1024xf32>
    %38 = vector.extract_strided_slice %2 {offsets = [0, 2], sizes = [2, 1], strides = [1, 1]} : vector<2x12xf32> to vector<2x1xf32>
    %39 = vector.broadcast %38 : vector<2x1xf32> to vector<2x1024xf32>
    %40 = arith.mulf %39, %26 : vector<2x1024xf32>
    %41 = arith.addf %37, %40 : vector<2x1024xf32>
    %c0_27 = arith.constant 0 : index
    %c0_28 = arith.constant 0 : index
    %c0_29 = arith.constant 0 : index
    %42 = vector.load %arg6[%c0_27, %c0_28, %c0_29] : memref<2x3x1024xf32, #tpu.memory_space<vmem>>, vector<2x1x1024xf32>
    %43 = vector.shape_cast %42 : vector<2x1x1024xf32> to vector<2x1024xf32>
    %44 = vector.shape_cast %41 : vector<2x1024xf32> to vector<2x1x1024xf32>
    tpu.vector_store %arg6[%c0_27, %c0_28, %c0_29], %44 {strides = array<i32>} : memref<2x3x1024xf32, #tpu.memory_space<vmem>>, vector<2x1x1024xf32>,
    %45 = vector.broadcast %30 : vector<2x1xf32> to vector<2x1024xf32>
    %46 = arith.mulf %45, %41 : vector<2x1024xf32>
    %47 = vector.extract_strided_slice %2 {offsets = [0, 10], sizes = [2, 1], strides = [1, 1]} : vector<2x12xf32> to vector<2x1xf32>
    %48 = vector.broadcast %47 : vector<2x1xf32> to vector<2x1024xf32>
    %49 = arith.addf %46, %48 : vector<2x1024xf32>
    %c0_30 = arith.constant 0 : index
    %c0_31 = arith.constant 0 : index
    %c0_32 = arith.constant 0 : index
    %50 = vector.load %arg7[%c0_30, %c0_31, %c0_32] : memref<2x3x1024xf32, #tpu.memory_space<vmem>>, vector<2x1x1024xf32>
    %51 = vector.shape_cast %50 : vector<2x1x1024xf32> to vector<2x1024xf32>
    %52 = vector.shape_cast %49 : vector<2x1024xf32> to vector<2x1x1024xf32>
    tpu.vector_store %arg7[%c0_30, %c0_31, %c0_32], %52 {strides = array<i32>} : memref<2x3x1024xf32, #tpu.memory_space<vmem>>, vector<2x1x1024xf32>,
    %53 = vector.extract_strided_slice %2 {offsets = [0, 3], sizes = [2, 1], strides = [1, 1]} : vector<2x12xf32> to vector<2x1xf32>
    %54 = vector.broadcast %53 : vector<2x1xf32> to vector<2x1024xf32>
    %55 = arith.mulf %54, %8 : vector<2x1024xf32>
    %56 = vector.extract_strided_slice %2 {offsets = [0, 4], sizes = [2, 1], strides = [1, 1]} : vector<2x12xf32> to vector<2x1xf32>
    %57 = vector.broadcast %56 : vector<2x1xf32> to vector<2x1024xf32>
    %58 = arith.mulf %57, %17 : vector<2x1024xf32>
    %59 = arith.addf %55, %58 : vector<2x1024xf32>
    %60 = vector.extract_strided_slice %2 {offsets = [0, 5], sizes = [2, 1], strides = [1, 1]} : vector<2x12xf32> to vector<2x1xf32>
    %61 = vector.broadcast %60 : vector<2x1xf32> to vector<2x1024xf32>
    %62 = arith.mulf %61, %26 : vector<2x1024xf32>
    %63 = arith.addf %59, %62 : vector<2x1024xf32>
    %c0_33 = arith.constant 0 : index
    %c1_34 = arith.constant 1 : index
    %c0_35 = arith.constant 0 : index
    %64 = vector.load %arg6[%c0_33, %c1_34, %c0_35] : memref<2x3x1024xf32, #tpu.memory_space<vmem>>, vector<2x1x1024xf32>
    %65 = vector.shape_cast %64 : vector<2x1x1024xf32> to vector<2x1024xf32>
    %66 = vector.shape_cast %63 : vector<2x1024xf32> to vector<2x1x1024xf32>
    tpu.vector_store %arg6[%c0_33, %c1_34, %c0_35], %66 {strides = array<i32>} : memref<2x3x1024xf32, #tpu.memory_space<vmem>>, vector<2x1x1024xf32>,
    %67 = vector.broadcast %30 : vector<2x1xf32> to vector<2x1024xf32>
    %68 = arith.mulf %67, %63 : vector<2x1024xf32>
    %69 = vector.extract_strided_slice %2 {offsets = [0, 11], sizes = [2, 1], strides = [1, 1]} : vector<2x12xf32> to vector<2x1xf32>
    %70 = vector.broadcast %69 : vector<2x1xf32> to vector<2x1024xf32>
    %71 = arith.addf %68, %70 : vector<2x1024xf32>
    %c0_36 = arith.constant 0 : index
    %c1_37 = arith.constant 1 : index
    %c0_38 = arith.constant 0 : index
    %72 = vector.load %arg7[%c0_36, %c1_37, %c0_38] : memref<2x3x1024xf32, #tpu.memory_space<vmem>>, vector<2x1x1024xf32>
    %73 = vector.shape_cast %72 : vector<2x1x1024xf32> to vector<2x1024xf32>
    %74 = vector.shape_cast %71 : vector<2x1024xf32> to vector<2x1x1024xf32>
    tpu.vector_store %arg7[%c0_36, %c1_37, %c0_38], %74 {strides = array<i32>} : memref<2x3x1024xf32, #tpu.memory_space<vmem>>, vector<2x1x1024xf32>,
    %75 = vector.extract_strided_slice %2 {offsets = [0, 6], sizes = [2, 1], strides = [1, 1]} : vector<2x12xf32> to vector<2x1xf32>
    %76 = vector.broadcast %75 : vector<2x1xf32> to vector<2x1024xf32>
    %77 = arith.mulf %76, %8 : vector<2x1024xf32>
    %78 = vector.extract_strided_slice %2 {offsets = [0, 7], sizes = [2, 1], strides = [1, 1]} : vector<2x12xf32> to vector<2x1xf32>
    %79 = vector.broadcast %78 : vector<2x1xf32> to vector<2x1024xf32>
    %80 = arith.mulf %79, %17 : vector<2x1024xf32>
    %81 = arith.addf %77, %80 : vector<2x1024xf32>
    %82 = vector.extract_strided_slice %2 {offsets = [0, 8], sizes = [2, 1], strides = [1, 1]} : vector<2x12xf32> to vector<2x1xf32>
    %83 = vector.broadcast %82 : vector<2x1xf32> to vector<2x1024xf32>
    %84 = arith.mulf %83, %26 : vector<2x1024xf32>
    %85 = arith.addf %81, %84 : vector<2x1024xf32>
    %c0_39 = arith.constant 0 : index
    %c2_40 = arith.constant 2 : index
    %c0_41 = arith.constant 0 : index
    %86 = vector.load %arg6[%c0_39, %c2_40, %c0_41] : memref<2x3x1024xf32, #tpu.memory_space<vmem>>, vector<2x1x1024xf32>
    %87 = vector.shape_cast %86 : vector<2x1x1024xf32> to vector<2x1024xf32>
    %88 = vector.shape_cast %85 : vector<2x1024xf32> to vector<2x1x1024xf32>
    tpu.vector_store %arg6[%c0_39, %c2_40, %c0_41], %88 {strides = array<i32>} : memref<2x3x1024xf32, #tpu.memory_space<vmem>>, vector<2x1x1024xf32>,
    %89 = vector.broadcast %30 : vector<2x1xf32> to vector<2x1024xf32>
    %90 = arith.mulf %89, %85 : vector<2x1024xf32>
    %c0_42 = arith.constant 0 : index
    %c2_43 = arith.constant 2 : index
    %c0_44 = arith.constant 0 : index
    %91 = vector.load %arg7[%c0_42, %c2_43, %c0_44] : memref<2x3x1024xf32, #tpu.memory_space<vmem>>, vector<2x1x1024xf32>
    %92 = vector.shape_cast %91 : vector<2x1x1024xf32> to vector<2x1024xf32>
    %93 = vector.shape_cast %90 : vector<2x1024xf32> to vector<2x1x1024xf32>
    tpu.vector_store %arg7[%c0_42, %c2_43, %c0_44], %93 {strides = array<i32>} : memref<2x3x1024xf32, #tpu.memory_space<vmem>>, vector<2x1x1024xf32>,
    return
  }
  func.func @transform_0(%arg0: i32) -> (i32, i32) {
    %c0_i32 = arith.constant 0 : i32
    %c0_i32_0 = arith.constant 0 : i32
    %c0_i32_1 = arith.constant 0 : i32
    return %c0_i32, %c0_i32_0 : i32, i32
  }
  func.func @transform_1(%arg0: i32) -> (i32, i32) {
    %c0_i32 = arith.constant 0 : i32
    %c0_i32_0 = arith.constant 0 : i32
    %c0_i32_1 = arith.constant 0 : i32
    return %c0_i32, %c0_i32_0 : i32, i32
  }
  func.func @transform_2(%arg0: i32) -> (i32, i32, i32) {
    %c0_i32 = arith.constant 0 : i32
    %c0_i32_0 = arith.constant 0 : i32
    %c0_i32_1 = arith.constant 0 : i32
    return %c0_i32, %c0_i32_0, %arg0 : i32, i32, i32
  }
  func.func @transform_3(%arg0: i32) -> (i32, i32) {
    %c0_i32 = arith.constant 0 : i32
    %c0_i32_0 = arith.constant 0 : i32
    return %c0_i32, %arg0 : i32, i32
  }
  func.func @transform_4(%arg0: i32) -> (i32, i32, i32) {
    %c0_i32 = arith.constant 0 : i32
    %c0_i32_0 = arith.constant 0 : i32
    %c0_i32_1 = arith.constant 0 : i32
    return %c0_i32, %c0_i32_0, %arg0 : i32, i32, i32
  }
  func.func @transform_5(%arg0: i32) -> (i32, i32, i32) {
    %c0_i32 = arith.constant 0 : i32
    %c0_i32_0 = arith.constant 0 : i32
    %c0_i32_1 = arith.constant 0 : i32
    return %c0_i32, %c0_i32_0, %arg0 : i32, i32, i32
  }
  func.func @transform_6(%arg0: i32) -> (i32, i32, i32) {
    %c0_i32 = arith.constant 0 : i32
    %c0_i32_0 = arith.constant 0 : i32
    %c0_i32_1 = arith.constant 0 : i32
    return %c0_i32, %c0_i32_0, %arg0 : i32, i32, i32
  }
}

</mosaic_0001>

<llo_original>
// kernel: bfmf_batch_forward.1
$region0: #{bfmf_batch_forward.1}
  #allocation0 [shape = 'u32[]', space=smem, size = 0x4, offset = 0x4, fixed_abs, tag = 'smem constant byte address 0x4 - core index']
  #allocation1 [shape = 'u32[144,128]{1,0:T(1,128)}', space=vmem, size = 0x12000, scoped, tag = 'internal scratch']
  %s0 = inlined_call_operand.hbm [shape: f32[2,128], index: 0, kind: input, shape index: {}]
  %s1 = inlined_call_operand.hbm [shape: f32[2,12], index: 1, kind: input, shape index: {}]
  %s2 = inlined_call_operand.hbm [shape: bf16[3,128,2048], index: 2, kind: input, shape index: {}]
  %s3 = inlined_call_operand.hbm [shape: f32[3,2048], index: 3, kind: input, shape index: {}]
  %s4 = inlined_call_operand.hbm [shape: f32[2,3,2048], index: 4, kind: output, shape index: {0}]
  %s5 = inlined_call_operand.hbm [shape: f32[2,3,2048], index: 5, kind: output, shape index: {1}]
  %s6 = inlined_call_operand.hbm [shape: f32[2,3,2048], index: 6, kind: output, shape index: {2}]
  %7 = xla_tuple %s4, %s5, %s6
  %s8 = sld [smem:[#allocation0]]
  $region81: #{bfmf_batch_forward.1} parent=0
    _
  %s10 = ssub.s32 1, %s8
  %s11 = scalar_select 0, %s10, %s8
  $region1: #{bfmf_batch_forward.1} parent=0
    #allocation2 [shape = 'u8[1024]{0}', space=vmem, size = 0x400, scoped, tag = 'input window, operand 0, single buffered']
    #allocation3 [shape = 's32[2]{0}', space=sflag, size = 0x8, scoped, tag = 'scoped memory for bfmf_batch_forward.1']
    #allocation4 [shape = 's32[2]{0}', space=sflag, size = 0x8, scoped, tag = 'scoped memory for bfmf_batch_forward.1']
    #allocation5 [shape = 'u8[1024]{0}', space=vmem, size = 0x400, scoped, tag = 'input window, operand 1, single buffered']
    #allocation6 [shape = 's32[1]{0}', space=sflag, size = 0x4, scoped, tag = 'scoped memory for bfmf_batch_forward.1']
    #allocation7 [shape = 'u8[1572864]{0}', space=vmem, size = 0x180000, scoped, tag = 'input window, operand 2']
    #allocation8 [shape = 'u8[32768]{0}', space=vmem, size = 0x8000, scoped, tag = 'input window, operand 3']
    #allocation9 [shape = 'u8[65536]{0}', space=vmem, size = 0x10000, scoped, tag = 'output window, operand 0']
    #allocation10 [shape = 'u8[65536]{0}', space=vmem, size = 0x10000, scoped, tag = 'output window, operand 1']
    #allocation11 [shape = 's32[2]{0}', space=sflag, size = 0x8, scoped, tag = 'scoped memory for bfmf_batch_forward.1']
    #allocation12 [shape = 'u8[65536]{0}', space=vmem, size = 0x10000, scoped, tag = 'output window, operand 2']
    %12 = vsyncpa [#allocation3], 0
    %13 = vsyncpa [#allocation6], 0
    %14 = vsyncpa [#allocation4], 0
    %s15 = scalar_lea.sflag [#allocation4], 1
    %16 = vsyncpa %s15, 0
    %17 = vsyncpa [#allocation11], 0
    %s18 = scalar_lea.sflag [#allocation11], 1
    %19 = vsyncpa %s18, 0
    loop: start=0, step=1, limit=4
    $region2: #{bfmf_batch_forward.1} parent=1 // loop_pre_header
      _
    $region3: #{bfmf_batch_forward.1} parent=1 // loop_header
      %s21 = sphi 0, %s25
      %p22 = scmp.ge.s32.totalorder %s21, 4
      %s29 = sphi 0, %s29
      %s31 = sphi 0, %s29
      %s32 = sphi 0, %s31
      %s46 = sphi 0, %s32
      %s50 = sphi 0, %s50
      %s52 = sphi 0, %s50
      %s53 = sphi 0, %s52
      %s67 = sphi 0, %s53
      %s73 = sphi 0, %s75
      %s76 = sphi 0, %s73
      %s77 = sphi 0, %s76
      %s93 = sphi 0, %s77
      %s99 = sphi 0, %s101
      %s102 = sphi 0, %s99
      %s103 = sphi 0, %s102
      %s119 = sphi 0, %s103
      %s125 = sphi 0, %s127
      %s128 = sphi 0, %s125
      %s129 = sphi 0, %s128
      %s145 = sphi 0, %s129
      %s151 = sphi 0, %s153
      %s154 = sphi 0, %s151
      %s155 = sphi 0, %s154
      %s171 = sphi 0, %s155
      %s177 = sphi 0, %s179
      %s180 = sphi 0, %s177
      %s181 = sphi 0, %s180
      %s197 = sphi 0, %s181
    $region4: #{bfmf_batch_forward.1} parent=1 // loop_header_branch
      %24 = sbr.rel (%p22) target = $region8
    $region5: #{bfmf_batch_forward.1} parent=1 // loop_body
      %s26 = ssub.s32 %s21, 1
      %s27 = ssub.s32 %s21, 2
      %s28 = sadd.s32 %s21, 1
      %s30 = sadd.s32 %s29, 1
      %p33 = scmp.eq.s32.totalorder %s21, 1
      %p34 = scmp.ne.s32.totalorder %s29, %s31
      %p35 = scmp.eq.s32.totalorder %s21, 0
      %p36 = por %p34, %p35
      %p37 = scmp.ne.s32.totalorder %s29, %s31
      %p38 = scmp.eq.s32.totalorder %s26, 1
      %p39 = por %p37, %p38
      %p40 = scmp.ne.s32.totalorder %s31, %s32
      %p41 = scmp.eq.s32.totalorder %s26, 0
      %p42 = por %p40, %p41
      %p43 = scmp.ne.s32.totalorder %s31, %s32
      %p44 = scmp.eq.s32.totalorder %s27, 1
      %p45 = por %p43, %p44
      %p47 = scmp.ne.s32.totalorder %s32, %s46
      %p48 = scmp.eq.s32.totalorder %s27, 0
      %p49 = por %p47, %p48
      %s51 = sadd.s32 %s50, 1
      %p54 = scmp.eq.s32.totalorder %s21, 1
      %p55 = scmp.ne.s32.totalorder %s50, %s52
      %p56 = scmp.eq.s32.totalorder %s21, 0
      %p57 = por %p55, %p56
      %p58 = scmp.ne.s32.totalorder %s50, %s52
      %p59 = scmp.eq.s32.totalorder %s26, 1
      %p60 = por %p58, %p59
      %p61 = scmp.ne.s32.totalorder %s52, %s53
      %p62 = scmp.eq.s32.totalorder %s26, 0
      %p63 = por %p61, %p62
      %p64 = scmp.ne.s32.totalorder %s52, %s53
      %p65 = scmp.eq.s32.totalorder %s27, 1
      %p66 = por %p64, %p65
      %p68 = scmp.ne.s32.totalorder %s53, %s67
      %p69 = scmp.eq.s32.totalorder %s27, 0
      %p70 = por %p68, %p69
      %s71 = ssub.s32 %s21, %s28
      %p72 = scmp.eq.s32.totalorder %s71, 0
      %s74 = sadd.s32 %s73, 1
      %s75 = scalar_select %p72, %s73, %s74
      %p78 = pneg %p72
      %p79 = scmp.eq.s32.totalorder %s21, 1
      %p80 = por %p78, %p79
      %p81 = scmp.ne.s32.totalorder %s73, %s76
      %p82 = scmp.eq.s32.totalorder %s21, 0
      %p83 = por %p81, %p82
      %p84 = scmp.ne.s32.totalorder %s73, %s76
      %p85 = scmp.eq.s32.totalorder %s26, 1
      %p86 = por %p84, %p85
      %p87 = scmp.ne.s32.totalorder %s76, %s77
      %p88 = scmp.eq.s32.totalorder %s26, 0
      %p89 = por %p87, %p88
      %p90 = scmp.ne.s32.totalorder %s76, %s77
      %p91 = scmp.eq.s32.totalorder %s27, 1
      %p92 = por %p90, %p91
      %p94 = scmp.ne.s32.totalorder %s77, %s93
      %p95 = scmp.eq.s32.totalorder %s27, 0
      %p96 = por %p94, %p95
      %s97 = ssub.s32 %s21, %s28
      %p98 = scmp.eq.s32.totalorder %s97, 0
      %s100 = sadd.s32 %s99, 1
      %s101 = scalar_select %p98, %s99, %s100
      %p104 = pneg %p98
      %p105 = scmp.eq.s32.totalorder %s21, 1
      %p106 = por %p104, %p105
      %p107 = scmp.ne.s32.totalorder %s99, %s102
      %p108 = scmp.eq.s32.totalorder %s21, 0
      %p109 = por %p107, %p108
      %p110 = scmp.ne.s32.totalorder %s99, %s102
      %p111 = scmp.eq.s32.totalorder %s26, 1
      %p112 = por %p110, %p111
      %p113 = scmp.ne.s32.totalorder %s102, %s103
      %p114 = scmp.eq.s32.totalorder %s26, 0
      %p115 = por %p113, %p114
      %p116 = scmp.ne.s32.totalorder %s102, %s103
      %p117 = scmp.eq.s32.totalorder %s27, 1
      %p118 = por %p116, %p117
      %p120 = scmp.ne.s32.totalorder %s103, %s119
      %p121 = scmp.eq.s32.totalorder %s27, 0
      %p122 = por %p120, %p121
      %s123 = ssub.s32 %s21, %s28
      %p124 = scmp.eq.s32.totalorder %s123, 0
      %s126 = sadd.s32 %s125, 1
      %s127 = scalar_select %p124, %s125, %s126
      %p130 = pneg %p124
      %p131 = scmp.eq.s32.totalorder %s21, 1
      %p132 = por %p130, %p131
      %p133 = scmp.ne.s32.totalorder %s125, %s128
      %p134 = scmp.eq.s32.totalorder %s21, 0
      %p135 = por %p133, %p134
      %p136 = scmp.ne.s32.totalorder %s125, %s128
      %p137 = scmp.eq.s32.totalorder %s26, 1
      %p138 = por %p136, %p137
      %p139 = scmp.ne.s32.totalorder %s128, %s129
      %p140 = scmp.eq.s32.totalorder %s26, 0
      %p141 = por %p139, %p140
      %p142 = scmp.ne.s32.totalorder %s128, %s129
      %p143 = scmp.eq.s32.totalorder %s27, 1
      %p144 = por %p142, %p143
      %p146 = scmp.ne.s32.totalorder %s129, %s145
      %p147 = scmp.eq.s32.totalorder %s27, 0
      %p148 = por %p146, %p147
      %s149 = ssub.s32 %s21, %s28
      %p150 = scmp.eq.s32.totalorder %s149, 0
      %s152 = sadd.s32 %s151, 1
      %s153 = scalar_select %p150, %s151, %s152
      %p156 = pneg %p150
      %p157 = scmp.eq.s32.totalorder %s21, 1
      %p158 = por %p156, %p157
      %p159 = scmp.ne.s32.totalorder %s151, %s154
      %p160 = scmp.eq.s32.totalorder %s21, 0
      %p161 = por %p159, %p160
      %p162 = scmp.ne.s32.totalorder %s151, %s154
      %p163 = scmp.eq.s32.totalorder %s26, 1
      %p164 = por %p162, %p163
      %p165 = scmp.ne.s32.totalorder %s154, %s155
      %p166 = scmp.eq.s32.totalorder %s26, 0
      %p167 = por %p165, %p166
      %p168 = scmp.ne.s32.totalorder %s154, %s155
      %p169 = scmp.eq.s32.totalorder %s27, 1
      %p170 = por %p168, %p169
      %p172 = scmp.ne.s32.totalorder %s155, %s171
      %p173 = scmp.eq.s32.totalorder %s27, 0
      %p174 = por %p172, %p173
      %s175 = ssub.s32 %s21, %s28
      %p176 = scmp.eq.s32.totalorder %s175, 0
      %s178 = sadd.s32 %s177, 1
      %s179 = scalar_select %p176, %s177, %s178
      %p182 = pneg %p176
      %p183 = scmp.eq.s32.totalorder %s21, 1
      %p184 = por %p182, %p183
      %p185 = scmp.ne.s32.totalorder %s177, %s180
      %p186 = scmp.eq.s32.totalorder %s21, 0
      %p187 = por %p185, %p186
      %p188 = scmp.ne.s32.totalorder %s177, %s180
      %p189 = scmp.eq.s32.totalorder %s26, 1
      %p190 = por %p188, %p189
      %p191 = scmp.ne.s32.totalorder %s180, %s181
      %p192 = scmp.eq.s32.totalorder %s26, 0
      %p193 = por %p191, %p192
      %p194 = scmp.ne.s32.totalorder %s180, %s181
      %p195 = scmp.eq.s32.totalorder %s27, 1
      %p196 = por %p194, %p195
      %p198 = scmp.ne.s32.totalorder %s181, %s197
      %p199 = scmp.eq.s32.totalorder %s27, 0
      %p200 = por %p198, %p199
      %p201 = scmp.le.s32.totalorder 1, %s21
      %p202 = scmp.lt.s32.totalorder %s21, 3
      %p203 = pnand %p201, %p202
      %p204 = pneg %p203
      // Predicated region
      $region9: #{bfmf_batch_forward.1} parent=5 // pred_check
        _
      $region10: #{bfmf_batch_forward.1} parent=5 // pred_check_branch
        %206 = sbr.rel (%p203) target = $region12
      $region11: #{bfmf_batch_forward.1} parent=5 // pred_region
        %s207 = ssub.s32 %s21, 1
        // Predicated region
        $region13: #{bfmf_batch_forward.1} parent=11 // pred_check
          %p208 = pneg %p42
        $region14: #{bfmf_batch_forward.1} parent=11 // pred_check_branch
          %210 = sbr.rel (%p208) target = $region16
        $region15: #{bfmf_batch_forward.1} parent=11 // pred_region
          %s212 = ssub.s32 32, 32
          %213 = vsyncadd [#allocation3], %s212
          %s215 = sshll.u32 [#allocation2], 4
          %s216 = int_to_ptr.vmem [resolvable:$true] %s215
          %218 = dma.hbm_to_vmem [thread:$0]  %s0, 32, %s216, [#allocation3]
        $region16: #{bfmf_batch_forward.1} parent=11 // pred_fallthru
          _
        // Predicated region
        $region17: #{bfmf_batch_forward.1} parent=11 // pred_check
          %p219 = pneg %p63
        $region18: #{bfmf_batch_forward.1} parent=11 // pred_check_branch
          %221 = sbr.rel (%p219) target = $region20
        $region19: #{bfmf_batch_forward.1} parent=11 // pred_region
          %s223 = ssub.s32 32, 32
          %224 = vsyncadd [#allocation6], %s223
          %s226 = sshll.u32 [#allocation5], 4
          %s227 = int_to_ptr.vmem [resolvable:$true] %s226
          %229 = dma.hbm_to_vmem [thread:$0]  %s1, 32, %s227, [#allocation6]
        $region20: #{bfmf_batch_forward.1} parent=11 // pred_fallthru
          _
      $region12: #{bfmf_batch_forward.1} parent=5 // pred_fallthru
        _
      %p230 = scmp.lt.s32.totalorder %s21, 2
      // Predicated region
      $region21: #{bfmf_batch_forward.1} parent=5 // pred_check
        %p231 = pneg %p230
      $region22: #{bfmf_batch_forward.1} parent=5 // pred_check_branch
        %233 = sbr.rel (%p231) target = $region24
      $region23: #{bfmf_batch_forward.1} parent=5 // pred_region
        // Predicated region
        $region25: #{bfmf_batch_forward.1} parent=23 // pred_check
          %p234 = pneg %p83
        $region26: #{bfmf_batch_forward.1} parent=23 // pred_check_branch
          %236 = sbr.rel (%p234) target = $region28
        $region27: #{bfmf_batch_forward.1} parent=23 // pred_region
          %s237 = sand.u32 %s21, 1
          %s238 = scalar_lea.sflag [#allocation3], %s237
          %s239 = sand.u32 %s73, 1
          %s240 = smul.addr %s239, 1536
          %s241 = scalar_lea.vmem [#allocation7], %s240
          %s242 = smul.u32 8, %s21
          %s244 = ssub.s32 24576, 24576
          %245 = vsyncadd %s238, %s244
          %s246 = smul.addr %s242, 64
          %s247 = scalar_lea.hbm %s2, %s246
          %s248 = sshll.u32 %s241, 4
          %s249 = int_to_ptr.vmem [resolvable:$true] %s248
          %254 = dma.hbm_to_vmem [thread:$0]  %s247, 24576, %s249, %s238, 1024, 512, 32
        $region28: #{bfmf_batch_forward.1} parent=23 // pred_fallthru
          _
        // Predicated region
        $region29: #{bfmf_batch_forward.1} parent=23 // pred_check
          %p255 = pneg %p109
        $region30: #{bfmf_batch_forward.1} parent=23 // pred_check_branch
          %257 = sbr.rel (%p255) target = $region32
        $region31: #{bfmf_batch_forward.1} parent=23 // pred_region
          %s258 = sand.u32 %s21, 1
          %s259 = scalar_lea.sflag [#allocation3], %s258
          %s260 = sand.u32 %s99, 1
          %s261 = smul.addr %s260, 32
          %s262 = scalar_lea.vmem [#allocation8], %s261
          %s263 = smul.u32 8, %s21
          %s265 = ssub.s32 512, 512
          %266 = vsyncadd %s259, %s265
          %s267 = smul.addr %s263, 64
          %s268 = scalar_lea.hbm %s3, %s267
          %s270 = sshll.u32 %s262, 4
          %s271 = int_to_ptr.vmem [resolvable:$true] %s270
          %273 = dma.hbm_to_vmem [thread:$0]  %s268, 512, %s271, %s259
        $region32: #{bfmf_batch_forward.1} parent=23 // pred_fallthru
          _
      $region24: #{bfmf_batch_forward.1} parent=5 // pred_fallthru
        _
      %p274 = scmp.le.s32.totalorder 1, %s21
      %p275 = scmp.lt.s32.totalorder %s21, 3
      %p276 = pnand %p274, %p275
      %p277 = pneg %p276
      // Predicated region
      $region33: #{bfmf_batch_forward.1} parent=5 // pred_check
        _
      $region34: #{bfmf_batch_forward.1} parent=5 // pred_check_branch
        %279 = sbr.rel (%p276) target = $region36
      $region35: #{bfmf_batch_forward.1} parent=5 // pred_region
        %s280 = ssub.s32 %s21, 1
        // Predicated region
        $region37: #{bfmf_batch_forward.1} parent=35 // pred_check
          %p281 = pneg %p42
        $region38: #{bfmf_batch_forward.1} parent=35 // pred_check_branch
          %283 = sbr.rel (%p281) target = $region40
        $region39: #{bfmf_batch_forward.1} parent=35 // pred_region
          %284 = dma.done [#allocation3], 32
        $region40: #{bfmf_batch_forward.1} parent=35 // pred_fallthru
          _
        // Predicated region
        $region41: #{bfmf_batch_forward.1} parent=35 // pred_check
          %p285 = pneg %p63
        $region42: #{bfmf_batch_forward.1} parent=35 // pred_check_branch
          %287 = sbr.rel (%p285) target = $region44
        $region43: #{bfmf_batch_forward.1} parent=35 // pred_region
          %288 = dma.done [#allocation6], 32
        $region44: #{bfmf_batch_forward.1} parent=35 // pred_fallthru
          _
        %s289 = sand.u32 %s26, 1
        %s290 = scalar_lea.sflag [#allocation3], %s289
        %s291 = sand.u32 %s76, 1
        %s292 = smul.addr %s291, 1536
        %s293 = scalar_lea.vmem [#allocation7], %s292
        // Predicated region
        $region45: #{bfmf_batch_forward.1} parent=35 // pred_check
          %p294 = pneg %p89
        $region46: #{bfmf_batch_forward.1} parent=35 // pred_check_branch
          %296 = sbr.rel (%p294) target = $region48
        $region47: #{bfmf_batch_forward.1} parent=35 // pred_region
          %297 = dma.done %s290, 24576
        $region48: #{bfmf_batch_forward.1} parent=35 // pred_fallthru
          _
        %s298 = sand.u32 %s26, 1
        %s299 = scalar_lea.sflag [#allocation3], %s298
        %s300 = sand.u32 %s102, 1
        %s301 = smul.addr %s300, 32
        %s302 = scalar_lea.vmem [#allocation8], %s301
        // Predicated region
        $region49: #{bfmf_batch_forward.1} parent=35 // pred_check
          %p303 = pneg %p115
        $region50: #{bfmf_batch_forward.1} parent=35 // pred_check_branch
          %305 = sbr.rel (%p303) target = $region52
        $region51: #{bfmf_batch_forward.1} parent=35 // pred_region
          %306 = dma.done %s299, 512
        $region52: #{bfmf_batch_forward.1} parent=35 // pred_fallthru
          _
        %p307 = pneg %p42
        %p308 = pneg %p39
        %p309 = pneg %p63
        %p310 = pneg %p60
        %s311 = sand.u32 %s26, 1
        %s312 = scalar_lea.sflag [#allocation3], %s311
        %s313 = sand.u32 %s76, 1
        %s314 = smul.addr %s313, 1536
        %s315 = scalar_lea.vmem [#allocation7], %s314
        %p316 = pneg %p89
        %p317 = pneg %p86
        %s318 = sand.u32 %s26, 1
        %s319 = scalar_lea.sflag [#allocation3], %s318
        %s320 = sand.u32 %s102, 1
        %s321 = smul.addr %s320, 32
        %s322 = scalar_lea.vmem [#allocation8], %s321
        %p323 = pneg %p115
        %p324 = pneg %p112
        %p325 = pneg %p141
        %p326 = pneg %p138
        %s327 = sand.u32 %s128, 1
        %s328 = scalar_lea.sflag [#allocation4], %s327
        %s329 = sand.u32 %s128, 1
        %s330 = smul.addr %s329, 64
        %s331 = scalar_lea.vmem [#allocation9], %s330
        %p332 = pneg %p167
        %p333 = pneg %p164
        %s334 = sand.u32 %s26, 1
        %s335 = scalar_lea.sflag [#allocation11], %s334
        %s336 = sand.u32 %s154, 1
        %s337 = smul.addr %s336, 64
        %s338 = scalar_lea.vmem [#allocation10], %s337
        %p339 = pneg %p193
        %p340 = pneg %p190
        %s341 = sand.u32 %s26, 1
        %s342 = scalar_lea.sflag [#allocation11], %s341
        %s343 = sand.u32 %s180, 1
        %s344 = smul.addr %s343, 64
        %s345 = scalar_lea.vmem [#allocation12], %s344
        %s346 = smul.u32 8, %s26
        %s347 = smul.u32 8, %s26
        %s348 = smul.u32 8, %s26
        %s349 = smul.u32 8, %s26
        %s350 = smul.u32 8, %s26
        %v352 = vld [vmem:[#allocation2] sm:$0x3]
        %v353 = vpack.c.bf16 %v352, %v352
        %v354 = vld [vmem:[#allocation5] sm:$0x3]
        %v355 = vld [vmem:[%s293] sm:$0xff]
        %v356 = vld [vmem:[%s293 + $0x8] sm:$0xff]
        %v357 = vld [vmem:[%s293 + $0x10] sm:$0xff]
        %v358 = vld [vmem:[%s293 + $0x18] sm:$0xff]
        %v359 = vld [vmem:[%s293 + $0x20] sm:$0xff]
        %v360 = vld [vmem:[%s293 + $0x28] sm:$0xff]
        %v361 = vld [vmem:[%s293 + $0x30] sm:$0xff]
        %v362 = vld [vmem:[%s293 + $0x38] sm:$0xff]
        %v363 = vld [vmem:[%s293 + $0x40] sm:$0xff]
        %v364 = vld [vmem:[%s293 + $0x48] sm:$0xff]
        %v365 = vld [vmem:[%s293 + $0x50] sm:$0xff]
        %v366 = vld [vmem:[%s293 + $0x58] sm:$0xff]
        %v367 = vld [vmem:[%s293 + $0x60] sm:$0xff]
        %v368 = vld [vmem:[%s293 + $0x68] sm:$0xff]
        %v369 = vld [vmem:[%s293 + $0x70] sm:$0xff]
        %v370 = vld [vmem:[%s293 + $0x78] sm:$0xff]
        %v371 = vld [vmem:[%s293 + $0x80] sm:$0xff]
        %v372 = vld [vmem:[%s293 + $0x88] sm:$0xff]
        %v373 = vld [vmem:[%s293 + $0x90] sm:$0xff]
        %v374 = vld [vmem:[%s293 + $0x98] sm:$0xff]
        %v375 = vld [vmem:[%s293 + $0xa0] sm:$0xff]
        %v376 = vld [vmem:[%s293 + $0xa8] sm:$0xff]
        %v377 = vld [vmem:[%s293 + $0xb0] sm:$0xff]
        %v378 = vld [vmem:[%s293 + $0xb8] sm:$0xff]
        %v379 = vld [vmem:[%s293 + $0xc0] sm:$0xff]
        %v380 = vld [vmem:[%s293 + $0xc8] sm:$0xff]
        %v381 = vld [vmem:[%s293 + $0xd0] sm:$0xff]
        %v382 = vld [vmem:[%s293 + $0xd8] sm:$0xff]
        %v383 = vld [vmem:[%s293 + $0xe0] sm:$0xff]
        %v384 = vld [vmem:[%s293 + $0xe8] sm:$0xff]
        %v385 = vld [vmem:[%s293 + $0xf0] sm:$0xff]
        %v386 = vld [vmem:[%s293 + $0xf8] sm:$0xff]
        %v387 = vld [vmem:[%s293 + $0x100] sm:$0xff]
        %v388 = vld [vmem:[%s293 + $0x108] sm:$0xff]
        %v389 = vld [vmem:[%s293 + $0x110] sm:$0xff]
        %v390 = vld [vmem:[%s293 + $0x118] sm:$0xff]
        %v391 = vld [vmem:[%s293 + $0x120] sm:$0xff]
        %v392 = vld [vmem:[%s293 + $0x128] sm:$0xff]
        %v393 = vld [vmem:[%s293 + $0x130] sm:$0xff]
        %v394 = vld [vmem:[%s293 + $0x138] sm:$0xff]
        %v395 = vld [vmem:[%s293 + $0x140] sm:$0xff]
        %v396 = vld [vmem:[%s293 + $0x148] sm:$0xff]
        %v397 = vld [vmem:[%s293 + $0x150] sm:$0xff]
        %v398 = vld [vmem:[%s293 + $0x158] sm:$0xff]
        %v399 = vld [vmem:[%s293 + $0x160] sm:$0xff]
        %v400 = vld [vmem:[%s293 + $0x168] sm:$0xff]
        %v401 = vld [vmem:[%s293 + $0x170] sm:$0xff]
        %v402 = vld [vmem:[%s293 + $0x178] sm:$0xff]
        %v403 = vld [vmem:[%s293 + $0x180] sm:$0xff]
        %v404 = vld [vmem:[%s293 + $0x188] sm:$0xff]
        %v405 = vld [vmem:[%s293 + $0x190] sm:$0xff]
        %v406 = vld [vmem:[%s293 + $0x198] sm:$0xff]
        %v407 = vld [vmem:[%s293 + $0x1a0] sm:$0xff]
        %v408 = vld [vmem:[%s293 + $0x1a8] sm:$0xff]
        %v409 = vld [vmem:[%s293 + $0x1b0] sm:$0xff]
        %v410 = vld [vmem:[%s293 + $0x1b8] sm:$0xff]
        %v411 = vld [vmem:[%s293 + $0x1c0] sm:$0xff]
        %v412 = vld [vmem:[%s293 + $0x1c8] sm:$0xff]
        %v413 = vld [vmem:[%s293 + $0x1d0] sm:$0xff]
        %v414 = vld [vmem:[%s293 + $0x1d8] sm:$0xff]
        %v415 = vld [vmem:[%s293 + $0x1e0] sm:$0xff]
        %v416 = vld [vmem:[%s293 + $0x1e8] sm:$0xff]
        %v417 = vld [vmem:[%s293 + $0x1f0] sm:$0xff]
        %v418 = vld [vmem:[%s293 + $0x1f8] sm:$0xff]
        %v419 = vld [vmem:[%s302] ss:$4 sm:$0xff]
        %v421 = vlaneseq
        %v422 = vshrl.u32 %v421, 7
        %v423 = vsub.s32 0, %v422
        %v424 = vrot.slane %v419, %v423
        %v425 = vlaneseq
        %v426 = vshrl.u32 %v425, 7
        %v427 = vsub.s32 1, %v426
        %v428 = vrot.slane %v419, %v427
        %v429 = vlaneseq
        %v430 = vshrl.u32 %v429, 7
        %v431 = vsub.s32 2, %v430
        %v432 = vrot.slane %v419, %v431
        %v433 = vlaneseq
        %v434 = vshrl.u32 %v433, 7
        %v435 = vsub.s32 3, %v434
        %v436 = vrot.slane %v419, %v435
        %v437 = vlaneseq
        %v438 = vshrl.u32 %v437, 7
        %v439 = vsub.s32 4, %v438
        %v440 = vrot.slane %v419, %v439
        %v441 = vlaneseq
        %v442 = vshrl.u32 %v441, 7
        %v443 = vsub.s32 5, %v442
        %v444 = vrot.slane %v419, %v443
        %v445 = vlaneseq
        %v446 = vshrl.u32 %v445, 7
        %v447 = vsub.s32 6, %v446
        %v448 = vrot.slane %v419, %v447
        %v449 = vlaneseq
        %v450 = vshrl.u32 %v449, 7
        %v451 = vsub.s32 7, %v450
        %v452 = vrot.slane %v419, %v451
        %v525 = vunpack.c.l.b16 %v355
        %v526 = vunpack.c.h.b16 %v355
        %v527 = vunpack.c.l.b16 %v356
        %v528 = vunpack.c.h.b16 %v356
        %v529 = vunpack.c.l.b16 %v357
        %v530 = vunpack.c.h.b16 %v357
        %v531 = vunpack.c.l.b16 %v358
        %v532 = vunpack.c.h.b16 %v358
        %v533 = vunpack.c.l.b16 %v359
        %v534 = vunpack.c.h.b16 %v359
        %v535 = vunpack.c.l.b16 %v360
        %v536 = vunpack.c.h.b16 %v360
        %v537 = vunpack.c.l.b16 %v361
        %v538 = vunpack.c.h.b16 %v361
        %v539 = vunpack.c.l.b16 %v362
        %v540 = vunpack.c.h.b16 %v362
        %v541 = vunpack.c.l.b16 %v363
        %v542 = vunpack.c.h.b16 %v363
        %v543 = vunpack.c.l.b16 %v364
        %v544 = vunpack.c.h.b16 %v364
        %v545 = vunpack.c.l.b16 %v365
        %v546 = vunpack.c.h.b16 %v365
        %v547 = vunpack.c.l.b16 %v366
        %v548 = vunpack.c.h.b16 %v366
        %v549 = vunpack.c.l.b16 %v367
        %v550 = vunpack.c.h.b16 %v367
        %v551 = vunpack.c.l.b16 %v368
        %v552 = vunpack.c.h.b16 %v368
        %v553 = vunpack.c.l.b16 %v369
        %v554 = vunpack.c.h.b16 %v369
        %v555 = vunpack.c.l.b16 %v370
        %v556 = vunpack.c.h.b16 %v370
        %v557 = vunpack.c.l.b16 %v371
        %v558 = vunpack.c.h.b16 %v371
        %v559 = vunpack.c.l.b16 %v372
        %v560 = vunpack.c.h.b16 %v372
        %v561 = vunpack.c.l.b16 %v373
        %v562 = vunpack.c.h.b16 %v373
        %v563 = vunpack.c.l.b16 %v374
        %v564 = vunpack.c.h.b16 %v374
        %v565 = vunpack.c.l.b16 %v375
        %v566 = vunpack.c.h.b16 %v375
        %v567 = vunpack.c.l.b16 %v376
        %v568 = vunpack.c.h.b16 %v376
        %v569 = vunpack.c.l.b16 %v377
        %v570 = vunpack.c.h.b16 %v377
        %v571 = vunpack.c.l.b16 %v378
        %v572 = vunpack.c.h.b16 %v378
        %v573 = vunpack.c.l.b16 %v379
        %v574 = vunpack.c.h.b16 %v379
        %v575 = vunpack.c.l.b16 %v380
        %v576 = vunpack.c.h.b16 %v380
        %v577 = vunpack.c.l.b16 %v381
        %v578 = vunpack.c.h.b16 %v381
        %v579 = vunpack.c.l.b16 %v382
        %v580 = vunpack.c.h.b16 %v382
        %v581 = vunpack.c.l.b16 %v383
        %v582 = vunpack.c.h.b16 %v383
        %v583 = vunpack.c.l.b16 %v384
        %v584 = vunpack.c.h.b16 %v384
        %v585 = vunpack.c.l.b16 %v385
        %v586 = vunpack.c.h.b16 %v385
        %v587 = vunpack.c.l.b16 %v386
        %v588 = vunpack.c.h.b16 %v386
        %v589 = vunpack.c.l.b16 %v387
        %v590 = vunpack.c.h.b16 %v387
        %v591 = vunpack.c.l.b16 %v388
        %v592 = vunpack.c.h.b16 %v388
        %v593 = vunpack.c.l.b16 %v389
        %v594 = vunpack.c.h.b16 %v389
        %v595 = vunpack.c.l.b16 %v390
        %v596 = vunpack.c.h.b16 %v390
        %v597 = vunpack.c.l.b16 %v391
        %v598 = vunpack.c.h.b16 %v391
        %v599 = vunpack.c.l.b16 %v392
        %v600 = vunpack.c.h.b16 %v392
        %v601 = vunpack.c.l.b16 %v393
        %v602 = vunpack.c.h.b16 %v393
        %v603 = vunpack.c.l.b16 %v394
        %v604 = vunpack.c.h.b16 %v394
        %v605 = vunpack.c.l.b16 %v395
        %v606 = vunpack.c.h.b16 %v395
        %v607 = vunpack.c.l.b16 %v396
        %v608 = vunpack.c.h.b16 %v396
        %v609 = vunpack.c.l.b16 %v397
        %v610 = vunpack.c.h.b16 %v397
        %v611 = vunpack.c.l.b16 %v398
        %v612 = vunpack.c.h.b16 %v398
        %v613 = vunpack.c.l.b16 %v399
        %v614 = vunpack.c.h.b16 %v399
        %v615 = vunpack.c.l.b16 %v400
        %v616 = vunpack.c.h.b16 %v400
        %v617 = vunpack.c.l.b16 %v401
        %v618 = vunpack.c.h.b16 %v401
        %v619 = vunpack.c.l.b16 %v402
        %v620 = vunpack.c.h.b16 %v402
        %v621 = vunpack.c.l.b16 %v403
        %v622 = vunpack.c.h.b16 %v403
        %v623 = vunpack.c.l.b16 %v404
        %v624 = vunpack.c.h.b16 %v404
        %v625 = vunpack.c.l.b16 %v405
        %v626 = vunpack.c.h.b16 %v405
        %v627 = vunpack.c.l.b16 %v406
        %v628 = vunpack.c.h.b16 %v406
        %v629 = vunpack.c.l.b16 %v407
        %v630 = vunpack.c.h.b16 %v407
        %v631 = vunpack.c.l.b16 %v408
        %v632 = vunpack.c.h.b16 %v408
        %v633 = vunpack.c.l.b16 %v409
        %v634 = vunpack.c.h.b16 %v409
        %v635 = vunpack.c.l.b16 %v410
        %v636 = vunpack.c.h.b16 %v410
        %v637 = vunpack.c.l.b16 %v411
        %v638 = vunpack.c.h.b16 %v411
        %v639 = vunpack.c.l.b16 %v412
        %v640 = vunpack.c.h.b16 %v412
        %v641 = vunpack.c.l.b16 %v413
        %v642 = vunpack.c.h.b16 %v413
        %v643 = vunpack.c.l.b16 %v414
        %v644 = vunpack.c.h.b16 %v414
        %v645 = vunpack.c.l.b16 %v415
        %v646 = vunpack.c.h.b16 %v415
        %v647 = vunpack.c.l.b16 %v416
        %v648 = vunpack.c.h.b16 %v416
        %v649 = vunpack.c.l.b16 %v417
        %v650 = vunpack.c.h.b16 %v417
        %v651 = vunpack.c.l.b16 %v418
        %v652 = vunpack.c.h.b16 %v418
        %v653 = vpack.c.b16 %v533, %v525
        %v654 = vpack.c.b16 %v534, %v526
        %v655 = vpack.c.b16 %v535, %v527
        %v656 = vpack.c.b16 %v536, %v528
        %v657 = vpack.c.b16 %v537, %v529
        %v658 = vpack.c.b16 %v538, %v530
        %v659 = vpack.c.b16 %v539, %v531
        %v660 = vpack.c.b16 %v540, %v532
        %v661 = vpack.c.b16 %v549, %v541
        %v662 = vpack.c.b16 %v550, %v542
        %v663 = vpack.c.b16 %v551, %v543
        %v664 = vpack.c.b16 %v552, %v544
        %v665 = vpack.c.b16 %v553, %v545
        %v666 = vpack.c.b16 %v554, %v546
        %v667 = vpack.c.b16 %v555, %v547
        %v668 = vpack.c.b16 %v556, %v548
        %v669 = vpack.c.b16 %v565, %v557
        %v670 = vpack.c.b16 %v566, %v558
        %v671 = vpack.c.b16 %v567, %v559
        %v672 = vpack.c.b16 %v568, %v560
        %v673 = vpack.c.b16 %v569, %v561
        %v674 = vpack.c.b16 %v570, %v562
        %v675 = vpack.c.b16 %v571, %v563
        %v676 = vpack.c.b16 %v572, %v564
        %v677 = vpack.c.b16 %v581, %v573
        %v678 = vpack.c.b16 %v582, %v574
        %v679 = vpack.c.b16 %v583, %v575
        %v680 = vpack.c.b16 %v584, %v576
        %v681 = vpack.c.b16 %v585, %v577
        %v682 = vpack.c.b16 %v586, %v578
        %v683 = vpack.c.b16 %v587, %v579
        %v684 = vpack.c.b16 %v588, %v580
        %v685 = vpack.c.b16 %v597, %v589
        %v686 = vpack.c.b16 %v598, %v590
        %v687 = vpack.c.b16 %v599, %v591
        %v688 = vpack.c.b16 %v600, %v592
        %v689 = vpack.c.b16 %v601, %v593
        %v690 = vpack.c.b16 %v602, %v594
        %v691 = vpack.c.b16 %v603, %v595
        %v692 = vpack.c.b16 %v604, %v596
        %v693 = vpack.c.b16 %v613, %v605
        %v694 = vpack.c.b16 %v614, %v606
        %v695 = vpack.c.b16 %v615, %v607
        %v696 = vpack.c.b16 %v616, %v608
        %v697 = vpack.c.b16 %v617, %v609
        %v698 = vpack.c.b16 %v618, %v610
        %v699 = vpack.c.b16 %v619, %v611
        %v700 = vpack.c.b16 %v620, %v612
        %v701 = vpack.c.b16 %v629, %v621
        %v702 = vpack.c.b16 %v630, %v622
        %v703 = vpack.c.b16 %v631, %v623
        %v704 = vpack.c.b16 %v632, %v624
        %v705 = vpack.c.b16 %v633, %v625
        %v706 = vpack.c.b16 %v634, %v626
        %v707 = vpack.c.b16 %v635, %v627
        %v708 = vpack.c.b16 %v636, %v628
        %v709 = vpack.c.b16 %v645, %v637
        %v710 = vpack.c.b16 %v646, %v638
        %v711 = vpack.c.b16 %v647, %v639
        %v712 = vpack.c.b16 %v648, %v640
        %v713 = vpack.c.b16 %v649, %v641
        %v714 = vpack.c.b16 %v650, %v642
        %v715 = vpack.c.b16 %v651, %v643
        %v716 = vpack.c.b16 %v652, %v644
        %781 = vmatprep.subr.bf16.mxu0 %v654
        %782 = vmatpush1.bf16.msra.mxu0 %v653
        %783 = vmatprep.subr.bf16.mxu0 %v662
        %784 = vmatpush1.bf16.msra.mxu0 %v661
        %785 = vmatprep.subr.bf16.mxu0 %v670
        %786 = vmatpush1.bf16.msra.mxu0 %v669
        %787 = vmatprep.subr.bf16.mxu0 %v678
        %788 = vmatpush1.bf16.msra.mxu0 %v677
        %789 = vmatprep.subr.bf16.mxu0 %v686
        %790 = vmatpush1.bf16.msra.mxu0 %v685
        %791 = vmatprep.subr.bf16.mxu0 %v694
        %792 = vmatpush1.bf16.msra.mxu0 %v693
        %793 = vmatprep.subr.bf16.mxu0 %v702
        %794 = vmatpush1.bf16.msra.mxu0 %v701
        %795 = vmatprep.subr.bf16.mxu0 %v710
        %796 = vmatpush1.bf16.msra.mxu0 %v709
        %797 = vmatprep.subr.bf16.mxu0 0
        %798 = vmatpush1.bf16.msra.mxu0 0
        %799 = vmatprep.subr.bf16.mxu0 0
        %800 = vmatpush1.bf16.msra.mxu0 0
        %801 = vmatprep.subr.bf16.mxu0 0
        %802 = vmatpush1.bf16.msra.mxu0 0
        %803 = vmatprep.subr.bf16.mxu0 0
        %804 = vmatpush1.bf16.msra.mxu0 0
        %805 = vmatprep.subr.bf16.mxu0 0
        %806 = vmatpush1.bf16.msra.mxu0 0
        %807 = vmatprep.subr.bf16.mxu0 0
        %808 = vmatpush1.bf16.msra.mxu0 0
        %809 = vmatprep.subr.bf16.mxu0 0
        %810 = vmatpush1.bf16.msra.mxu0 0
        %811 = vmatprep.subr.bf16.mxu0 0
        %812 = vmatpush1.bf16.msra.mxu0 0
        %813 = vmatprep.mubr.bf16.mxu0 0
        %814 = vmatmul.mubr.bf16.gmra.mrb[0].mxu0 %v353
        %v815 = vpop.f32.mrb[0].mxu0
        %v816 = vadd.f32 %v424, %v815
        %v817 = vpop.f32.mrb[0].mxu0
        %v818 = vadd.f32 %v428, %v817
        %v819 = vpop.f32.mrb[0].mxu0
        %v820 = vpop.f32.mrb[0].mxu0
        %821 = vdwg.mxu0
        %822 = vmatprep.subr.bf16.mxu0 %v656
        %823 = vmatpush1.bf16.msra.mxu0 %v655
        %824 = vmatprep.subr.bf16.mxu0 %v664
        %825 = vmatpush1.bf16.msra.mxu0 %v663
        %826 = vmatprep.subr.bf16.mxu0 %v672
        %827 = vmatpush1.bf16.msra.mxu0 %v671
        %828 = vmatprep.subr.bf16.mxu0 %v680
        %829 = vmatpush1.bf16.msra.mxu0 %v679
        %830 = vmatprep.subr.bf16.mxu0 %v688
        %831 = vmatpush1.bf16.msra.mxu0 %v687
        %832 = vmatprep.subr.bf16.mxu0 %v696
        %833 = vmatpush1.bf16.msra.mxu0 %v695
        %834 = vmatprep.subr.bf16.mxu0 %v704
        %835 = vmatpush1.bf16.msra.mxu0 %v703
        %836 = vmatprep.subr.bf16.mxu0 %v712
        %837 = vmatpush1.bf16.msra.mxu0 %v711
        %838 = vmatprep.subr.bf16.mxu0 0
        %839 = vmatpush1.bf16.msra.mxu0 0
        %840 = vmatprep.subr.bf16.mxu0 0
        %841 = vmatpush1.bf16.msra.mxu0 0
        %842 = vmatprep.subr.bf16.mxu0 0
        %843 = vmatpush1.bf16.msra.mxu0 0
        %844 = vmatprep.subr.bf16.mxu0 0
        %845 = vmatpush1.bf16.msra.mxu0 0
        %846 = vmatprep.subr.bf16.mxu0 0
        %847 = vmatpush1.bf16.msra.mxu0 0
        %848 = vmatprep.subr.bf16.mxu0 0
        %849 = vmatpush1.bf16.msra.mxu0 0
        %850 = vmatprep.subr.bf16.mxu0 0
        %851 = vmatpush1.bf16.msra.mxu0 0
        %852 = vmatprep.subr.bf16.mxu0 0
        %853 = vmatpush1.bf16.msra.mxu0 0
        %854 = vmatprep.mubr.bf16.mxu0 0
        %855 = vmatmul.mubr.bf16.gmra.mrb[0].mxu0 %v353
        %v856 = vpop.f32.mrb[0].mxu0
        %v857 = vadd.f32 %v432, %v856
        %v858 = vpop.f32.mrb[0].mxu0
        %v859 = vadd.f32 %v436, %v858
        %v860 = vpop.f32.mrb[0].mxu0
        %v861 = vpop.f32.mrb[0].mxu0
        %862 = vdwg.mxu0
        %863 = vmatprep.subr.bf16.mxu0 %v658
        %864 = vmatpush1.bf16.msra.mxu0 %v657
        %865 = vmatprep.subr.bf16.mxu0 %v666
        %866 = vmatpush1.bf16.msra.mxu0 %v665
        %867 = vmatprep.subr.bf16.mxu0 %v674
        %868 = vmatpush1.bf16.msra.mxu0 %v673
        %869 = vmatprep.subr.bf16.mxu0 %v682
        %870 = vmatpush1.bf16.msra.mxu0 %v681
        %871 = vmatprep.subr.bf16.mxu0 %v690
        %872 = vmatpush1.bf16.msra.mxu0 %v689
        %873 = vmatprep.subr.bf16.mxu0 %v698
        %874 = vmatpush1.bf16.msra.mxu0 %v697
        %875 = vmatprep.subr.bf16.mxu0 %v706
        %876 = vmatpush1.bf16.msra.mxu0 %v705
        %877 = vmatprep.subr.bf16.mxu0 %v714
        %878 = vmatpush1.bf16.msra.mxu0 %v713
        %879 = vmatprep.subr.bf16.mxu0 0
        %880 = vmatpush1.bf16.msra.mxu0 0
        %881 = vmatprep.subr.bf16.mxu0 0
        %882 = vmatpush1.bf16.msra.mxu0 0
        %883 = vmatprep.subr.bf16.mxu0 0
        %884 = vmatpush1.bf16.msra.mxu0 0
        %885 = vmatprep.subr.bf16.mxu0 0
        %886 = vmatpush1.bf16.msra.mxu0 0
        %887 = vmatprep.subr.bf16.mxu0 0
        %888 = vmatpush1.bf16.msra.mxu0 0
        %889 = vmatprep.subr.bf16.mxu0 0
        %890 = vmatpush1.bf16.msra.mxu0 0
        %891 = vmatprep.subr.bf16.mxu0 0
        %892 = vmatpush1.bf16.msra.mxu0 0
        %893 = vmatprep.subr.bf16.mxu0 0
        %894 = vmatpush1.bf16.msra.mxu0 0
        %895 = vmatprep.mubr.bf16.mxu0 0
        %896 = vmatmul.mubr.bf16.gmra.mrb[0].mxu0 %v353
        %v897 = vpop.f32.mrb[0].mxu0
        %v898 = vadd.f32 %v440, %v897
        %v899 = vpop.f32.mrb[0].mxu0
        %v900 = vadd.f32 %v444, %v899
        %v901 = vpop.f32.mrb[0].mxu0
        %v902 = vpop.f32.mrb[0].mxu0
        %903 = vdwg.mxu0
        %904 = vmatprep.subr.bf16.mxu0 %v660
        %905 = vmatpush1.bf16.msra.mxu0 %v659
        %906 = vmatprep.subr.bf16.mxu0 %v668
        %907 = vmatpush1.bf16.msra.mxu0 %v667
        %908 = vmatprep.subr.bf16.mxu0 %v676
        %909 = vmatpush1.bf16.msra.mxu0 %v675
        %910 = vmatprep.subr.bf16.mxu0 %v684
        %911 = vmatpush1.bf16.msra.mxu0 %v683
        %912 = vmatprep.subr.bf16.mxu0 %v692
        %913 = vmatpush1.bf16.msra.mxu0 %v691
        %914 = vmatprep.subr.bf16.mxu0 %v700
        %915 = vmatpush1.bf16.msra.mxu0 %v699
        %916 = vmatprep.subr.bf16.mxu0 %v708
        %917 = vmatpush1.bf16.msra.mxu0 %v707
        %918 = vmatprep.subr.bf16.mxu0 %v716
        %919 = vmatpush1.bf16.msra.mxu0 %v715
        %920 = vmatprep.subr.bf16.mxu0 0
        %921 = vmatpush1.bf16.msra.mxu0 0
        %922 = vmatprep.subr.bf16.mxu0 0
        %923 = vmatpush1.bf16.msra.mxu0 0
        %924 = vmatprep.subr.bf16.mxu0 0
        %925 = vmatpush1.bf16.msra.mxu0 0
        %926 = vmatprep.subr.bf16.mxu0 0
        %927 = vmatpush1.bf16.msra.mxu0 0
        %928 = vmatprep.subr.bf16.mxu0 0
        %929 = vmatpush1.bf16.msra.mxu0 0
        %930 = vmatprep.subr.bf16.mxu0 0
        %931 = vmatpush1.bf16.msra.mxu0 0
        %932 = vmatprep.subr.bf16.mxu0 0
        %933 = vmatpush1.bf16.msra.mxu0 0
        %934 = vmatprep.subr.bf16.mxu0 0
        %935 = vmatpush1.bf16.msra.mxu0 0
        %936 = vmatprep.mubr.bf16.mxu0 0
        %937 = vmatmul.mubr.bf16.gmra.mrb[0].mxu0 %v353
        %v938 = vpop.f32.mrb[0].mxu0
        %v939 = vadd.f32 %v448, %v938
        %v940 = vpop.f32.mrb[0].mxu0
        %v941 = vadd.f32 %v452, %v940
        %v942 = vpop.f32.mrb[0].mxu0
        %v943 = vpop.f32.mrb[0].mxu0
        %944 = vdwg.mxu0
        %v953 = vcombine.low %v816, %v818
        %v954 = vcombine.low %v857, %v859
        %v955 = vcombine.low %v898, %v900
        %v956 = vcombine.low %v939, %v941
        %v958 = vunpack.c.l.s4 1966171168
        %v959 = vunpack.c.0.s8 %v958
        %v960 = vlaneseq
        %v961 = vshrl.u32 %v960, 7
        %v962 = vsub.s32 %v959, %v961
        %v963 = vrot.slane %v953, %v962
        %v965 = vunpack.c.l.s4 1966171168
        %v966 = vunpack.c.0.s8 %v965
        %v967 = vlaneseq
        %v968 = vshrl.u32 %v967, 7
        %v969 = vsub.s32 %v966, %v968
        %v970 = vrot.slane %v954, %v969
        %v972 = vunpack.c.l.s4 1966171168
        %v973 = vunpack.c.0.s8 %v972
        %v974 = vlaneseq
        %v975 = vshrl.u32 %v974, 7
        %v976 = vsub.s32 %v973, %v975
        %v977 = vrot.slane %v955, %v976
        %v979 = vunpack.c.l.s4 1966171168
        %v980 = vunpack.c.0.s8 %v979
        %v981 = vlaneseq
        %v982 = vshrl.u32 %v981, 7
        %v983 = vsub.s32 %v980, %v982
        %v984 = vrot.slane %v956, %v983
        %v985 = vcombine.low %v963, %v970
        %v986 = vcombine.high %v963, %v970
        %v987 = vcombine.low %v977, %v984
        %v988 = vcombine.high %v977, %v984
        %v990 = vunpack.c.l.s4 1966171168
        %v991 = vunpack.c.0.s8 %v990
        %v992 = vlaneseq
        %v993 = vshrl.u32 %v992, 7
        %v994 = vsub.s32 %v991, %v993
        %v995 = vrot.slane %v985, %v994
        %v997 = vunpack.c.l.s4 1966171168
        %v998 = vunpack.c.0.s8 %v997
        %v999 = vlaneseq
        %v1000 = vshrl.u32 %v999, 7
        %v1001 = vsub.s32 %v998, %v1000
        %v1002 = vrot.slane %v986, %v1001
        %v1004 = vunpack.c.l.s4 1966171168
        %v1005 = vunpack.c.0.s8 %v1004
        %v1006 = vlaneseq
        %v1007 = vshrl.u32 %v1006, 7
        %v1008 = vsub.s32 %v1005, %v1007
        %v1009 = vrot.slane %v987, %v1008
        %v1011 = vunpack.c.l.s4 1966171168
        %v1012 = vunpack.c.0.s8 %v1011
        %v1013 = vlaneseq
        %v1014 = vshrl.u32 %v1013, 7
        %v1015 = vsub.s32 %v1012, %v1014
        %v1016 = vrot.slane %v988, %v1015
        %v1017 = vcombine.low %v995, %v1009
        %v1018 = vcombine.low %v1002, %v1016
        %1021 = vst [vmem:[%s331] ss:$4 sm:$0xff] %v1017
        %s1022 = scalar_lea.vmem %s331, 32 [#allocation9]
        %1023 = vst [vmem:[%s1022] ss:$4 sm:$0xff] %v1018
        %s1024 = scalar_lea.vmem %s293, 512 [#allocation7]
        %v1025 = vld [vmem:[%s1024] sm:$0xff]
        %v1026 = vld [vmem:[%s1024 + $0x8] sm:$0xff]
        %v1027 = vld [vmem:[%s1024 + $0x10] sm:$0xff]
        %v1028 = vld [vmem:[%s1024 + $0x18] sm:$0xff]
        %v1029 = vld [vmem:[%s1024 + $0x20] sm:$0xff]
        %v1030 = vld [vmem:[%s1024 + $0x28] sm:$0xff]
        %v1031 = vld [vmem:[%s1024 + $0x30] sm:$0xff]
        %v1032 = vld [vmem:[%s1024 + $0x38] sm:$0xff]
        %v1033 = vld [vmem:[%s1024 + $0x40] sm:$0xff]
        %v1034 = vld [vmem:[%s1024 + $0x48] sm:$0xff]
        %v1035 = vld [vmem:[%s1024 + $0x50] sm:$0xff]
        %v1036 = vld [vmem:[%s1024 + $0x58] sm:$0xff]
        %v1037 = vld [vmem:[%s1024 + $0x60] sm:$0xff]
        %v1038 = vld [vmem:[%s1024 + $0x68] sm:$0xff]
        %v1039 = vld [vmem:[%s1024 + $0x70] sm:$0xff]
        %v1040 = vld [vmem:[%s1024 + $0x78] sm:$0xff]
        %v1041 = vld [vmem:[%s1024 + $0x80] sm:$0xff]
        %v1042 = vld [vmem:[%s1024 + $0x88] sm:$0xff]
        %v1043 = vld [vmem:[%s1024 + $0x90] sm:$0xff]
        %v1044 = vld [vmem:[%s1024 + $0x98] sm:$0xff]
        %v1045 = vld [vmem:[%s1024 + $0xa0] sm:$0xff]
        %v1046 = vld [vmem:[%s1024 + $0xa8] sm:$0xff]
        %v1047 = vld [vmem:[%s1024 + $0xb0] sm:$0xff]
        %v1048 = vld [vmem:[%s1024 + $0xb8] sm:$0xff]
        %v1049 = vld [vmem:[%s1024 + $0xc0] sm:$0xff]
        %v1050 = vld [vmem:[%s1024 + $0xc8] sm:$0xff]
        %v1051 = vld [vmem:[%s1024 + $0xd0] sm:$0xff]
        %v1052 = vld [vmem:[%s1024 + $0xd8] sm:$0xff]
        %v1053 = vld [vmem:[%s1024 + $0xe0] sm:$0xff]
        %v1054 = vld [vmem:[%s1024 + $0xe8] sm:$0xff]
        %v1055 = vld [vmem:[%s1024 + $0xf0] sm:$0xff]
        %v1056 = vld [vmem:[%s1024 + $0xf8] sm:$0xff]
        %v1057 = vld [vmem:[%s1024 + $0x100] sm:$0xff]
        %v1058 = vld [vmem:[%s1024 + $0x108] sm:$0xff]
        %v1059 = vld [vmem:[%s1024 + $0x110] sm:$0xff]
        %v1060 = vld [vmem:[%s1024 + $0x118] sm:$0xff]
        %v1061 = vld [vmem:[%s1024 + $0x120] sm:$0xff]
        %v1062 = vld [vmem:[%s1024 + $0x128] sm:$0xff]
        %v1063 = vld [vmem:[%s1024 + $0x130] sm:$0xff]
        %v1064 = vld [vmem:[%s1024 + $0x138] sm:$0xff]
        %v1065 = vld [vmem:[%s1024 + $0x140] sm:$0xff]
        %v1066 = vld [vmem:[%s1024 + $0x148] sm:$0xff]
        %v1067 = vld [vmem:[%s1024 + $0x150] sm:$0xff]
        %v1068 = vld [vmem:[%s1024 + $0x158] sm:$0xff]
        %v1069 = vld [vmem:[%s1024 + $0x160] sm:$0xff]
        %v1070 = vld [vmem:[%s1024 + $0x168] sm:$0xff]
        %v1071 = vld [vmem:[%s1024 + $0x170] sm:$0xff]
        %v1072 = vld [vmem:[%s1024 + $0x178] sm:$0xff]
        %v1073 = vld [vmem:[%s1024 + $0x180] sm:$0xff]
        %v1074 = vld [vmem:[%s1024 + $0x188] sm:$0xff]
        %v1075 = vld [vmem:[%s1024 + $0x190] sm:$0xff]
        %v1076 = vld [vmem:[%s1024 + $0x198] sm:$0xff]
        %v1077 = vld [vmem:[%s1024 + $0x1a0] sm:$0xff]
        %v1078 = vld [vmem:[%s1024 + $0x1a8] sm:$0xff]
        %v1079 = vld [vmem:[%s1024 + $0x1b0] sm:$0xff]
        %v1080 = vld [vmem:[%s1024 + $0x1b8] sm:$0xff]
        %v1081 = vld [vmem:[%s1024 + $0x1c0] sm:$0xff]
        %v1082 = vld [vmem:[%s1024 + $0x1c8] sm:$0xff]
        %v1083 = vld [vmem:[%s1024 + $0x1d0] sm:$0xff]
        %v1084 = vld [vmem:[%s1024 + $0x1d8] sm:$0xff]
        %v1085 = vld [vmem:[%s1024 + $0x1e0] sm:$0xff]
        %v1086 = vld [vmem:[%s1024 + $0x1e8] sm:$0xff]
        %v1087 = vld [vmem:[%s1024 + $0x1f0] sm:$0xff]
        %v1088 = vld [vmem:[%s1024 + $0x1f8] sm:$0xff]
        %s1089 = scalar_lea.vmem %s302, 1 [#allocation8]
        %v1090 = vld [vmem:[%s1089] ss:$4 sm:$0xff]
        %v1092 = vlaneseq
        %v1093 = vshrl.u32 %v1092, 7
        %v1094 = vsub.s32 0, %v1093
        %v1095 = vrot.slane %v1090, %v1094
        %v1096 = vlaneseq
        %v1097 = vshrl.u32 %v1096, 7
        %v1098 = vsub.s32 1, %v1097
        %v1099 = vrot.slane %v1090, %v1098
        %v1100 = vlaneseq
        %v1101 = vshrl.u32 %v1100, 7
        %v1102 = vsub.s32 2, %v1101
        %v1103 = vrot.slane %v1090, %v1102
        %v1104 = vlaneseq
        %v1105 = vshrl.u32 %v1104, 7
        %v1106 = vsub.s32 3, %v1105
        %v1107 = vrot.slane %v1090, %v1106
        %v1108 = vlaneseq
        %v1109 = vshrl.u32 %v1108, 7
        %v1110 = vsub.s32 4, %v1109
        %v1111 = vrot.slane %v1090, %v1110
        %v1112 = vlaneseq
        %v1113 = vshrl.u32 %v1112, 7
        %v1114 = vsub.s32 5, %v1113
        %v1115 = vrot.slane %v1090, %v1114
        %v1116 = vlaneseq
        %v1117 = vshrl.u32 %v1116, 7
        %v1118 = vsub.s32 6, %v1117
        %v1119 = vrot.slane %v1090, %v1118
        %v1120 = vlaneseq
        %v1121 = vshrl.u32 %v1120, 7
        %v1122 = vsub.s32 7, %v1121
        %v1123 = vrot.slane %v1090, %v1122
        %v1196 = vunpack.c.l.b16 %v1025
        %v1197 = vunpack.c.h.b16 %v1025
        %v1198 = vunpack.c.l.b16 %v1026
        %v1199 = vunpack.c.h.b16 %v1026
        %v1200 = vunpack.c.l.b16 %v1027
        %v1201 = vunpack.c.h.b16 %v1027
        %v1202 = vunpack.c.l.b16 %v1028
        %v1203 = vunpack.c.h.b16 %v1028
        %v1204 = vunpack.c.l.b16 %v1029
        %v1205 = vunpack.c.h.b16 %v1029
        %v1206 = vunpack.c.l.b16 %v1030
        %v1207 = vunpack.c.h.b16 %v1030
        %v1208 = vunpack.c.l.b16 %v1031
        %v1209 = vunpack.c.h.b16 %v1031
        %v1210 = vunpack.c.l.b16 %v1032
        %v1211 = vunpack.c.h.b16 %v1032
        %v1212 = vunpack.c.l.b16 %v1033
        %v1213 = vunpack.c.h.b16 %v1033
        %v1214 = vunpack.c.l.b16 %v1034
        %v1215 = vunpack.c.h.b16 %v1034
        %v1216 = vunpack.c.l.b16 %v1035
        %v1217 = vunpack.c.h.b16 %v1035
        %v1218 = vunpack.c.l.b16 %v1036
        %v1219 = vunpack.c.h.b16 %v1036
        %v1220 = vunpack.c.l.b16 %v1037
        %v1221 = vunpack.c.h.b16 %v1037
        %v1222 = vunpack.c.l.b16 %v1038
        %v1223 = vunpack.c.h.b16 %v1038
        %v1224 = vunpack.c.l.b16 %v1039
        %v1225 = vunpack.c.h.b16 %v1039
        %v1226 = vunpack.c.l.b16 %v1040
        %v1227 = vunpack.c.h.b16 %v1040
        %v1228 = vunpack.c.l.b16 %v1041
        %v1229 = vunpack.c.h.b16 %v1041
        %v1230 = vunpack.c.l.b16 %v1042
        %v1231 = vunpack.c.h.b16 %v1042
        %v1232 = vunpack.c.l.b16 %v1043
        %v1233 = vunpack.c.h.b16 %v1043
        %v1234 = vunpack.c.l.b16 %v1044
        %v1235 = vunpack.c.h.b16 %v1044
        %v1236 = vunpack.c.l.b16 %v1045
        %v1237 = vunpack.c.h.b16 %v1045
        %v1238 = vunpack.c.l.b16 %v1046
        %v1239 = vunpack.c.h.b16 %v1046
        %v1240 = vunpack.c.l.b16 %v1047
        %v1241 = vunpack.c.h.b16 %v1047
        %v1242 = vunpack.c.l.b16 %v1048
        %v1243 = vunpack.c.h.b16 %v1048
        %v1244 = vunpack.c.l.b16 %v1049
        %v1245 = vunpack.c.h.b16 %v1049
        %v1246 = vunpack.c.l.b16 %v1050
        %v1247 = vunpack.c.h.b16 %v1050
        %v1248 = vunpack.c.l.b16 %v1051
        %v1249 = vunpack.c.h.b16 %v1051
        %v1250 = vunpack.c.l.b16 %v1052
        %v1251 = vunpack.c.h.b16 %v1052
        %v1252 = vunpack.c.l.b16 %v1053
        %v1253 = vunpack.c.h.b16 %v1053
        %v1254 = vunpack.c.l.b16 %v1054
        %v1255 = vunpack.c.h.b16 %v1054
        %v1256 = vunpack.c.l.b16 %v1055
        %v1257 = vunpack.c.h.b16 %v1055
        %v1258 = vunpack.c.l.b16 %v1056
        %v1259 = vunpack.c.h.b16 %v1056
        %v1260 = vunpack.c.l.b16 %v1057
        %v1261 = vunpack.c.h.b16 %v1057
        %v1262 = vunpack.c.l.b16 %v1058
        %v1263 = vunpack.c.h.b16 %v1058
        %v1264 = vunpack.c.l.b16 %v1059
        %v1265 = vunpack.c.h.b16 %v1059
        %v1266 = vunpack.c.l.b16 %v1060
        %v1267 = vunpack.c.h.b16 %v1060
        %v1268 = vunpack.c.l.b16 %v1061
        %v1269 = vunpack.c.h.b16 %v1061
        %v1270 = vunpack.c.l.b16 %v1062
        %v1271 = vunpack.c.h.b16 %v1062
        %v1272 = vunpack.c.l.b16 %v1063
        %v1273 = vunpack.c.h.b16 %v1063
        %v1274 = vunpack.c.l.b16 %v1064
        %v1275 = vunpack.c.h.b16 %v1064
        %v1276 = vunpack.c.l.b16 %v1065
        %v1277 = vunpack.c.h.b16 %v1065
        %v1278 = vunpack.c.l.b16 %v1066
        %v1279 = vunpack.c.h.b16 %v1066
        %v1280 = vunpack.c.l.b16 %v1067
        %v1281 = vunpack.c.h.b16 %v1067
        %v1282 = vunpack.c.l.b16 %v1068
        %v1283 = vunpack.c.h.b16 %v1068
        %v1284 = vunpack.c.l.b16 %v1069
        %v1285 = vunpack.c.h.b16 %v1069
        %v1286 = vunpack.c.l.b16 %v1070
        %v1287 = vunpack.c.h.b16 %v1070
        %v1288 = vunpack.c.l.b16 %v1071
        %v1289 = vunpack.c.h.b16 %v1071
        %v1290 = vunpack.c.l.b16 %v1072
        %v1291 = vunpack.c.h.b16 %v1072
        %v1292 = vunpack.c.l.b16 %v1073
        %v1293 = vunpack.c.h.b16 %v1073
        %v1294 = vunpack.c.l.b16 %v1074
        %v1295 = vunpack.c.h.b16 %v1074
        %v1296 = vunpack.c.l.b16 %v1075
        %v1297 = vunpack.c.h.b16 %v1075
        %v1298 = vunpack.c.l.b16 %v1076
        %v1299 = vunpack.c.h.b16 %v1076
        %v1300 = vunpack.c.l.b16 %v1077
        %v1301 = vunpack.c.h.b16 %v1077
        %v1302 = vunpack.c.l.b16 %v1078
        %v1303 = vunpack.c.h.b16 %v1078
        %v1304 = vunpack.c.l.b16 %v1079
        %v1305 = vunpack.c.h.b16 %v1079
        %v1306 = vunpack.c.l.b16 %v1080
        %v1307 = vunpack.c.h.b16 %v1080
        %v1308 = vunpack.c.l.b16 %v1081
        %v1309 = vunpack.c.h.b16 %v1081
        %v1310 = vunpack.c.l.b16 %v1082
        %v1311 = vunpack.c.h.b16 %v1082
        %v1312 = vunpack.c.l.b16 %v1083
        %v1313 = vunpack.c.h.b16 %v1083
        %v1314 = vunpack.c.l.b16 %v1084
        %v1315 = vunpack.c.h.b16 %v1084
        %v1316 = vunpack.c.l.b16 %v1085
        %v1317 = vunpack.c.h.b16 %v1085
        %v1318 = vunpack.c.l.b16 %v1086
        %v1319 = vunpack.c.h.b16 %v1086
        %v1320 = vunpack.c.l.b16 %v1087
        %v1321 = vunpack.c.h.b16 %v1087
        %v1322 = vunpack.c.l.b16 %v1088
        %v1323 = vunpack.c.h.b16 %v1088
        %v1324 = vpack.c.b16 %v1204, %v1196
        %v1325 = vpack.c.b16 %v1205, %v1197
        %v1326 = vpack.c.b16 %v1206, %v1198
        %v1327 = vpack.c.b16 %v1207, %v1199
        %v1328 = vpack.c.b16 %v1208, %v1200
        %v1329 = vpack.c.b16 %v1209, %v1201
        %v1330 = vpack.c.b16 %v1210, %v1202
        %v1331 = vpack.c.b16 %v1211, %v1203
        %v1332 = vpack.c.b16 %v1220, %v1212
        %v1333 = vpack.c.b16 %v1221, %v1213
        %v1334 = vpack.c.b16 %v1222, %v1214
        %v1335 = vpack.c.b16 %v1223, %v1215
        %v1336 = vpack.c.b16 %v1224, %v1216
        %v1337 = vpack.c.b16 %v1225, %v1217
        %v1338 = vpack.c.b16 %v1226, %v1218
        %v1339 = vpack.c.b16 %v1227, %v1219
        %v1340 = vpack.c.b16 %v1236, %v1228
        %v1341 = vpack.c.b16 %v1237, %v1229
        %v1342 = vpack.c.b16 %v1238, %v1230
        %v1343 = vpack.c.b16 %v1239, %v1231
        %v1344 = vpack.c.b16 %v1240, %v1232
        %v1345 = vpack.c.b16 %v1241, %v1233
        %v1346 = vpack.c.b16 %v1242, %v1234
        %v1347 = vpack.c.b16 %v1243, %v1235
        %v1348 = vpack.c.b16 %v1252, %v1244
        %v1349 = vpack.c.b16 %v1253, %v1245
        %v1350 = vpack.c.b16 %v1254, %v1246
        %v1351 = vpack.c.b16 %v1255, %v1247
        %v1352 = vpack.c.b16 %v1256, %v1248
        %v1353 = vpack.c.b16 %v1257, %v1249
        %v1354 = vpack.c.b16 %v1258, %v1250
        %v1355 = vpack.c.b16 %v1259, %v1251
        %v1356 = vpack.c.b16 %v1268, %v1260
        %v1357 = vpack.c.b16 %v1269, %v1261
        %v1358 = vpack.c.b16 %v1270, %v1262
        %v1359 = vpack.c.b16 %v1271, %v1263
        %v1360 = vpack.c.b16 %v1272, %v1264
        %v1361 = vpack.c.b16 %v1273, %v1265
        %v1362 = vpack.c.b16 %v1274, %v1266
        %v1363 = vpack.c.b16 %v1275, %v1267
        %v1364 = vpack.c.b16 %v1284, %v1276
        %v1365 = vpack.c.b16 %v1285, %v1277
        %v1366 = vpack.c.b16 %v1286, %v1278
        %v1367 = vpack.c.b16 %v1287, %v1279
        %v1368 = vpack.c.b16 %v1288, %v1280
        %v1369 = vpack.c.b16 %v1289, %v1281
        %v1370 = vpack.c.b16 %v1290, %v1282
        %v1371 = vpack.c.b16 %v1291, %v1283
        %v1372 = vpack.c.b16 %v1300, %v1292
        %v1373 = vpack.c.b16 %v1301, %v1293
        %v1374 = vpack.c.b16 %v1302, %v1294
        %v1375 = vpack.c.b16 %v1303, %v1295
        %v1376 = vpack.c.b16 %v1304, %v1296
        %v1377 = vpack.c.b16 %v1305, %v1297
        %v1378 = vpack.c.b16 %v1306, %v1298
        %v1379 = vpack.c.b16 %v1307, %v1299
        %v1380 = vpack.c.b16 %v1316, %v1308
        %v1381 = vpack.c.b16 %v1317, %v1309
        %v1382 = vpack.c.b16 %v1318, %v1310
        %v1383 = vpack.c.b16 %v1319, %v1311
        %v1384 = vpack.c.b16 %v1320, %v1312
        %v1385 = vpack.c.b16 %v1321, %v1313
        %v1386 = vpack.c.b16 %v1322, %v1314
        %v1387 = vpack.c.b16 %v1323, %v1315
        %1452 = vmatprep.subr.bf16.mxu0 %v1325
        %1453 = vmatpush1.bf16.msra.mxu0 %v1324
        %1454 = vmatprep.subr.bf16.mxu0 %v1333
        %1455 = vmatpush1.bf16.msra.mxu0 %v1332
        %1456 = vmatprep.subr.bf16.mxu0 %v1341
        %1457 = vmatpush1.bf16.msra.mxu0 %v1340
        %1458 = vmatprep.subr.bf16.mxu0 %v1349
        %1459 = vmatpush1.bf16.msra.mxu0 %v1348
        %1460 = vmatprep.subr.bf16.mxu0 %v1357
        %1461 = vmatpush1.bf16.msra.mxu0 %v1356
        %1462 = vmatprep.subr.bf16.mxu0 %v1365
        %1463 = vmatpush1.bf16.msra.mxu0 %v1364
        %1464 = vmatprep.subr.bf16.mxu0 %v1373
        %1465 = vmatpush1.bf16.msra.mxu0 %v1372
        %1466 = vmatprep.subr.bf16.mxu0 %v1381
        %1467 = vmatpush1.bf16.msra.mxu0 %v1380
        %1468 = vmatprep.subr.bf16.mxu0 0
        %1469 = vmatpush1.bf16.msra.mxu0 0
        %1470 = vmatprep.subr.bf16.mxu0 0
        %1471 = vmatpush1.bf16.msra.mxu0 0
        %1472 = vmatprep.subr.bf16.mxu0 0
        %1473 = vmatpush1.bf16.msra.mxu0 0
        %1474 = vmatprep.subr.bf16.mxu0 0
        %1475 = vmatpush1.bf16.msra.mxu0 0
        %1476 = vmatprep.subr.bf16.mxu0 0
        %1477 = vmatpush1.bf16.msra.mxu0 0
        %1478 = vmatprep.subr.bf16.mxu0 0
        %1479 = vmatpush1.bf16.msra.mxu0 0
        %1480 = vmatprep.subr.bf16.mxu0 0
        %1481 = vmatpush1.bf16.msra.mxu0 0
        %1482 = vmatprep.subr.bf16.mxu0 0
        %1483 = vmatpush1.bf16.msra.mxu0 0
        %1484 = vmatprep.mubr.bf16.mxu0 0
        %1485 = vmatmul.mubr.bf16.gmra.mrb[0].mxu0 %v353
        %v1486 = vpop.f32.mrb[0].mxu0
        %v1487 = vadd.f32 %v1095, %v1486
        %v1488 = vpop.f32.mrb[0].mxu0
        %v1489 = vadd.f32 %v1099, %v1488
        %v1490 = vpop.f32.mrb[0].mxu0
        %v1491 = vpop.f32.mrb[0].mxu0
        %1492 = vdwg.mxu0
        %1493 = vmatprep.subr.bf16.mxu0 %v1327
        %1494 = vmatpush1.bf16.msra.mxu0 %v1326
        %1495 = vmatprep.subr.bf16.mxu0 %v1335
        %1496 = vmatpush1.bf16.msra.mxu0 %v1334
        %1497 = vmatprep.subr.bf16.mxu0 %v1343
        %1498 = vmatpush1.bf16.msra.mxu0 %v1342
        %1499 = vmatprep.subr.bf16.mxu0 %v1351
        %1500 = vmatpush1.bf16.msra.mxu0 %v1350
        %1501 = vmatprep.subr.bf16.mxu0 %v1359
        %1502 = vmatpush1.bf16.msra.mxu0 %v1358
        %1503 = vmatprep.subr.bf16.mxu0 %v1367
        %1504 = vmatpush1.bf16.msra.mxu0 %v1366
        %1505 = vmatprep.subr.bf16.mxu0 %v1375
        %1506 = vmatpush1.bf16.msra.mxu0 %v1374
        %1507 = vmatprep.subr.bf16.mxu0 %v1383
        %1508 = vmatpush1.bf16.msra.mxu0 %v1382
        %1509 = vmatprep.subr.bf16.mxu0 0
        %1510 = vmatpush1.bf16.msra.mxu0 0
        %1511 = vmatprep.subr.bf16.mxu0 0
        %1512 = vmatpush1.bf16.msra.mxu0 0
        %1513 = vmatprep.subr.bf16.mxu0 0
        %1514 = vmatpush1.bf16.msra.mxu0 0
        %1515 = vmatprep.subr.bf16.mxu0 0
        %1516 = vmatpush1.bf16.msra.mxu0 0
        %1517 = vmatprep.subr.bf16.mxu0 0
        %1518 = vmatpush1.bf16.msra.mxu0 0
        %1519 = vmatprep.subr.bf16.mxu0 0
        %1520 = vmatpush1.bf16.msra.mxu0 0
        %1521 = vmatprep.subr.bf16.mxu0 0
        %1522 = vmatpush1.bf16.msra.mxu0 0
        %1523 = vmatprep.subr.bf16.mxu0 0
        %1524 = vmatpush1.bf16.msra.mxu0 0
        %1525 = vmatprep.mubr.bf16.mxu0 0
        %1526 = vmatmul.mubr.bf16.gmra.mrb[0].mxu0 %v353
        %v1527 = vpop.f32.mrb[0].mxu0
        %v1528 = vadd.f32 %v1103, %v1527
        %v1529 = vpop.f32.mrb[0].mxu0
        %v1530 = vadd.f32 %v1107, %v1529
        %v1531 = vpop.f32.mrb[0].mxu0
        %v1532 = vpop.f32.mrb[0].mxu0
        %1533 = vdwg.mxu0
        %1534 = vmatprep.subr.bf16.mxu0 %v1329
        %1535 = vmatpush1.bf16.msra.mxu0 %v1328
        %1536 = vmatprep.subr.bf16.mxu0 %v1337
        %1537 = vmatpush1.bf16.msra.mxu0 %v1336
        %1538 = vmatprep.subr.bf16.mxu0 %v1345
        %1539 = vmatpush1.bf16.msra.mxu0 %v1344
        %1540 = vmatprep.subr.bf16.mxu0 %v1353
        %1541 = vmatpush1.bf16.msra.mxu0 %v1352
        %1542 = vmatprep.subr.bf16.mxu0 %v1361
        %1543 = vmatpush1.bf16.msra.mxu0 %v1360
        %1544 = vmatprep.subr.bf16.mxu0 %v1369
        %1545 = vmatpush1.bf16.msra.mxu0 %v1368
        %1546 = vmatprep.subr.bf16.mxu0 %v1377
        %1547 = vmatpush1.bf16.msra.mxu0 %v1376
        %1548 = vmatprep.subr.bf16.mxu0 %v1385
        %1549 = vmatpush1.bf16.msra.mxu0 %v1384
        %1550 = vmatprep.subr.bf16.mxu0 0
        %1551 = vmatpush1.bf16.msra.mxu0 0
        %1552 = vmatprep.subr.bf16.mxu0 0
        %1553 = vmatpush1.bf16.msra.mxu0 0
        %1554 = vmatprep.subr.bf16.mxu0 0
        %1555 = vmatpush1.bf16.msra.mxu0 0
        %1556 = vmatprep.subr.bf16.mxu0 0
        %1557 = vmatpush1.bf16.msra.mxu0 0
        %1558 = vmatprep.subr.bf16.mxu0 0
        %1559 = vmatpush1.bf16.msra.mxu0 0
        %1560 = vmatprep.subr.bf16.mxu0 0
        %1561 = vmatpush1.bf16.msra.mxu0 0
        %1562 = vmatprep.subr.bf16.mxu0 0
        %1563 = vmatpush1.bf16.msra.mxu0 0
        %1564 = vmatprep.subr.bf16.mxu0 0
        %1565 = vmatpush1.bf16.msra.mxu0 0
        %1566 = vmatprep.mubr.bf16.mxu0 0
        %1567 = vmatmul.mubr.bf16.gmra.mrb[0].mxu0 %v353
        %v1568 = vpop.f32.mrb[0].mxu0
        %v1569 = vadd.f32 %v1111, %v1568
        %v1570 = vpop.f32.mrb[0].mxu0
        %v1571 = vadd.f32 %v1115, %v1570
        %v1572 = vpop.f32.mrb[0].mxu0
        %v1573 = vpop.f32.mrb[0].mxu0
        %1574 = vdwg.mxu0
        %1575 = vmatprep.subr.bf16.mxu0 %v1331
        %1576 = vmatpush1.bf16.msra.mxu0 %v1330
        %1577 = vmatprep.subr.bf16.mxu0 %v1339
        %1578 = vmatpush1.bf16.msra.mxu0 %v1338
        %1579 = vmatprep.subr.bf16.mxu0 %v1347
        %1580 = vmatpush1.bf16.msra.mxu0 %v1346
        %1581 = vmatprep.subr.bf16.mxu0 %v1355
        %1582 = vmatpush1.bf16.msra.mxu0 %v1354
        %1583 = vmatprep.subr.bf16.mxu0 %v1363
        %1584 = vmatpush1.bf16.msra.mxu0 %v1362
        %1585 = vmatprep.subr.bf16.mxu0 %v1371
        %1586 = vmatpush1.bf16.msra.mxu0 %v1370
        %1587 = vmatprep.subr.bf16.mxu0 %v1379
        %1588 = vmatpush1.bf16.msra.mxu0 %v1378
        %1589 = vmatprep.subr.bf16.mxu0 %v1387
        %1590 = vmatpush1.bf16.msra.mxu0 %v1386
        %1591 = vmatprep.subr.bf16.mxu0 0
        %1592 = vmatpush1.bf16.msra.mxu0 0
        %1593 = vmatprep.subr.bf16.mxu0 0
        %1594 = vmatpush1.bf16.msra.mxu0 0
        %1595 = vmatprep.subr.bf16.mxu0 0
        %1596 = vmatpush1.bf16.msra.mxu0 0
        %1597 = vmatprep.subr.bf16.mxu0 0
        %1598 = vmatpush1.bf16.msra.mxu0 0
        %1599 = vmatprep.subr.bf16.mxu0 0
        %1600 = vmatpush1.bf16.msra.mxu0 0
        %1601 = vmatprep.subr.bf16.mxu0 0
        %1602 = vmatpush1.bf16.msra.mxu0 0
        %1603 = vmatprep.subr.bf16.mxu0 0
        %1604 = vmatpush1.bf16.msra.mxu0 0
        %1605 = vmatprep.subr.bf16.mxu0 0
        %1606 = vmatpush1.bf16.msra.mxu0 0
        %1607 = vmatprep.mubr.bf16.mxu0 0
        %1608 = vmatmul.mubr.bf16.gmra.mrb[0].mxu0 %v353
        %v1609 = vpop.f32.mrb[0].mxu0
        %v1610 = vadd.f32 %v1119, %v1609
        %v1611 = vpop.f32.mrb[0].mxu0
        %v1612 = vadd.f32 %v1123, %v1611
        %v1613 = vpop.f32.mrb[0].mxu0
        %v1614 = vpop.f32.mrb[0].mxu0
        %1615 = vdwg.mxu0
        %v1624 = vcombine.low %v1487, %v1489
        %v1625 = vcombine.low %v1528, %v1530
        %v1626 = vcombine.low %v1569, %v1571
        %v1627 = vcombine.low %v1610, %v1612
        %v1629 = vunpack.c.l.s4 1966171168
        %v1630 = vunpack.c.0.s8 %v1629
        %v1631 = vlaneseq
        %v1632 = vshrl.u32 %v1631, 7
        %v1633 = vsub.s32 %v1630, %v1632
        %v1634 = vrot.slane %v1624, %v1633
        %v1636 = vunpack.c.l.s4 1966171168
        %v1637 = vunpack.c.0.s8 %v1636
        %v1638 = vlaneseq
        %v1639 = vshrl.u32 %v1638, 7
        %v1640 = vsub.s32 %v1637, %v1639
        %v1641 = vrot.slane %v1625, %v1640
        %v1643 = vunpack.c.l.s4 1966171168
        %v1644 = vunpack.c.0.s8 %v1643
        %v1645 = vlaneseq
        %v1646 = vshrl.u32 %v1645, 7
        %v1647 = vsub.s32 %v1644, %v1646
        %v1648 = vrot.slane %v1626, %v1647
        %v1650 = vunpack.c.l.s4 1966171168
        %v1651 = vunpack.c.0.s8 %v1650
        %v1652 = vlaneseq
        %v1653 = vshrl.u32 %v1652, 7
        %v1654 = vsub.s32 %v1651, %v1653
        %v1655 = vrot.slane %v1627, %v1654
        %v1656 = vcombine.low %v1634, %v1641
        %v1657 = vcombine.high %v1634, %v1641
        %v1658 = vcombine.low %v1648, %v1655
        %v1659 = vcombine.high %v1648, %v1655
        %v1661 = vunpack.c.l.s4 1966171168
        %v1662 = vunpack.c.0.s8 %v1661
        %v1663 = vlaneseq
        %v1664 = vshrl.u32 %v1663, 7
        %v1665 = vsub.s32 %v1662, %v1664
        %v1666 = vrot.slane %v1656, %v1665
        %v1668 = vunpack.c.l.s4 1966171168
        %v1669 = vunpack.c.0.s8 %v1668
        %v1670 = vlaneseq
        %v1671 = vshrl.u32 %v1670, 7
        %v1672 = vsub.s32 %v1669, %v1671
        %v1673 = vrot.slane %v1657, %v1672
        %v1675 = vunpack.c.l.s4 1966171168
        %v1676 = vunpack.c.0.s8 %v1675
        %v1677 = vlaneseq
        %v1678 = vshrl.u32 %v1677, 7
        %v1679 = vsub.s32 %v1676, %v1678
        %v1680 = vrot.slane %v1658, %v1679
        %v1682 = vunpack.c.l.s4 1966171168
        %v1683 = vunpack.c.0.s8 %v1682
        %v1684 = vlaneseq
        %v1685 = vshrl.u32 %v1684, 7
        %v1686 = vsub.s32 %v1683, %v1685
        %v1687 = vrot.slane %v1659, %v1686
        %v1688 = vcombine.low %v1666, %v1680
        %v1689 = vcombine.low %v1673, %v1687
        %s1692 = scalar_lea.vmem %s331, 1 [#allocation9]
        %1693 = vst [vmem:[%s1692] ss:$4 sm:$0xff] %v1688
        %s1694 = scalar_lea.vmem %s331, 33 [#allocation9]
        %1695 = vst [vmem:[%s1694] ss:$4 sm:$0xff] %v1689
        %s1696 = scalar_lea.vmem %s293, 1024 [#allocation7]
        %v1697 = vld [vmem:[%s1696] sm:$0xff]
        %v1698 = vld [vmem:[%s1696 + $0x8] sm:$0xff]
        %v1699 = vld [vmem:[%s1696 + $0x10] sm:$0xff]
        %v1700 = vld [vmem:[%s1696 + $0x18] sm:$0xff]
        %v1701 = vld [vmem:[%s1696 + $0x20] sm:$0xff]
        %v1702 = vld [vmem:[%s1696 + $0x28] sm:$0xff]
        %v1703 = vld [vmem:[%s1696 + $0x30] sm:$0xff]
        %v1704 = vld [vmem:[%s1696 + $0x38] sm:$0xff]
        %v1705 = vld [vmem:[%s1696 + $0x40] sm:$0xff]
        %v1706 = vld [vmem:[%s1696 + $0x48] sm:$0xff]
        %v1707 = vld [vmem:[%s1696 + $0x50] sm:$0xff]
        %v1708 = vld [vmem:[%s1696 + $0x58] sm:$0xff]
        %v1709 = vld [vmem:[%s1696 + $0x60] sm:$0xff]
        %v1710 = vld [vmem:[%s1696 + $0x68] sm:$0xff]
        %v1711 = vld [vmem:[%s1696 + $0x70] sm:$0xff]
        %v1712 = vld [vmem:[%s1696 + $0x78] sm:$0xff]
        %v1713 = vld [vmem:[%s1696 + $0x80] sm:$0xff]
        %v1714 = vld [vmem:[%s1696 + $0x88] sm:$0xff]
        %v1715 = vld [vmem:[%s1696 + $0x90] sm:$0xff]
        %v1716 = vld [vmem:[%s1696 + $0x98] sm:$0xff]
        %v1717 = vld [vmem:[%s1696 + $0xa0] sm:$0xff]
        %v1718 = vld [vmem:[%s1696 + $0xa8] sm:$0xff]
        %v1719 = vld [vmem:[%s1696 + $0xb0] sm:$0xff]
        %v1720 = vld [vmem:[%s1696 + $0xb8] sm:$0xff]
        %v1721 = vld [vmem:[%s1696 + $0xc0] sm:$0xff]
        %v1722 = vld [vmem:[%s1696 + $0xc8] sm:$0xff]
        %v1723 = vld [vmem:[%s1696 + $0xd0] sm:$0xff]
        %v1724 = vld [vmem:[%s1696 + $0xd8] sm:$0xff]
        %v1725 = vld [vmem:[%s1696 + $0xe0] sm:$0xff]
        %v1726 = vld [vmem:[%s1696 + $0xe8] sm:$0xff]
        %v1727 = vld [vmem:[%s1696 + $0xf0] sm:$0xff]
        %v1728 = vld [vmem:[%s1696 + $0xf8] sm:$0xff]
        %v1729 = vld [vmem:[%s1696 + $0x100] sm:$0xff]
        %v1730 = vld [vmem:[%s1696 + $0x108] sm:$0xff]
        %v1731 = vld [vmem:[%s1696 + $0x110] sm:$0xff]
        %v1732 = vld [vmem:[%s1696 + $0x118] sm:$0xff]
        %v1733 = vld [vmem:[%s1696 + $0x120] sm:$0xff]
        %v1734 = vld [vmem:[%s1696 + $0x128] sm:$0xff]
        %v1735 = vld [vmem:[%s1696 + $0x130] sm:$0xff]
        %v1736 = vld [vmem:[%s1696 + $0x138] sm:$0xff]
        %v1737 = vld [vmem:[%s1696 + $0x140] sm:$0xff]
        %v1738 = vld [vmem:[%s1696 + $0x148] sm:$0xff]
        %v1739 = vld [vmem:[%s1696 + $0x150] sm:$0xff]
        %v1740 = vld [vmem:[%s1696 + $0x158] sm:$0xff]
        %v1741 = vld [vmem:[%s1696 + $0x160] sm:$0xff]
        %v1742 = vld [vmem:[%s1696 + $0x168] sm:$0xff]
        %v1743 = vld [vmem:[%s1696 + $0x170] sm:$0xff]
        %v1744 = vld [vmem:[%s1696 + $0x178] sm:$0xff]
        %v1745 = vld [vmem:[%s1696 + $0x180] sm:$0xff]
        %v1746 = vld [vmem:[%s1696 + $0x188] sm:$0xff]
        %v1747 = vld [vmem:[%s1696 + $0x190] sm:$0xff]
        %v1748 = vld [vmem:[%s1696 + $0x198] sm:$0xff]
        %v1749 = vld [vmem:[%s1696 + $0x1a0] sm:$0xff]
        %v1750 = vld [vmem:[%s1696 + $0x1a8] sm:$0xff]
        %v1751 = vld [vmem:[%s1696 + $0x1b0] sm:$0xff]
        %v1752 = vld [vmem:[%s1696 + $0x1b8] sm:$0xff]
        %v1753 = vld [vmem:[%s1696 + $0x1c0] sm:$0xff]
        %v1754 = vld [vmem:[%s1696 + $0x1c8] sm:$0xff]
        %v1755 = vld [vmem:[%s1696 + $0x1d0] sm:$0xff]
        %v1756 = vld [vmem:[%s1696 + $0x1d8] sm:$0xff]
        %v1757 = vld [vmem:[%s1696 + $0x1e0] sm:$0xff]
        %v1758 = vld [vmem:[%s1696 + $0x1e8] sm:$0xff]
        %v1759 = vld [vmem:[%s1696 + $0x1f0] sm:$0xff]
        %v1760 = vld [vmem:[%s1696 + $0x1f8] sm:$0xff]
        %s1761 = scalar_lea.vmem %s302, 2 [#allocation8]
        %v1762 = vld [vmem:[%s1761] ss:$4 sm:$0xff]
        %v1764 = vlaneseq
        %v1765 = vshrl.u32 %v1764, 7
        %v1766 = vsub.s32 0, %v1765
        %v1767 = vrot.slane %v1762, %v1766
        %v1768 = vlaneseq
        %v1769 = vshrl.u32 %v1768, 7
        %v1770 = vsub.s32 1, %v1769
        %v1771 = vrot.slane %v1762, %v1770
        %v1772 = vlaneseq
        %v1773 = vshrl.u32 %v1772, 7
        %v1774 = vsub.s32 2, %v1773
        %v1775 = vrot.slane %v1762, %v1774
        %v1776 = vlaneseq
        %v1777 = vshrl.u32 %v1776, 7
        %v1778 = vsub.s32 3, %v1777
        %v1779 = vrot.slane %v1762, %v1778
        %v1780 = vlaneseq
        %v1781 = vshrl.u32 %v1780, 7
        %v1782 = vsub.s32 4, %v1781
        %v1783 = vrot.slane %v1762, %v1782
        %v1784 = vlaneseq
        %v1785 = vshrl.u32 %v1784, 7
        %v1786 = vsub.s32 5, %v1785
        %v1787 = vrot.slane %v1762, %v1786
        %v1788 = vlaneseq
        %v1789 = vshrl.u32 %v1788, 7
        %v1790 = vsub.s32 6, %v1789
        %v1791 = vrot.slane %v1762, %v1790
        %v1792 = vlaneseq
        %v1793 = vshrl.u32 %v1792, 7
        %v1794 = vsub.s32 7, %v1793
        %v1795 = vrot.slane %v1762, %v1794
        %v1868 = vunpack.c.l.b16 %v1697
        %v1869 = vunpack.c.h.b16 %v1697
        %v1870 = vunpack.c.l.b16 %v1698
        %v1871 = vunpack.c.h.b16 %v1698
        %v1872 = vunpack.c.l.b16 %v1699
        %v1873 = vunpack.c.h.b16 %v1699
        %v1874 = vunpack.c.l.b16 %v1700
        %v1875 = vunpack.c.h.b16 %v1700
        %v1876 = vunpack.c.l.b16 %v1701
        %v1877 = vunpack.c.h.b16 %v1701
        %v1878 = vunpack.c.l.b16 %v1702
        %v1879 = vunpack.c.h.b16 %v1702
        %v1880 = vunpack.c.l.b16 %v1703
        %v1881 = vunpack.c.h.b16 %v1703
        %v1882 = vunpack.c.l.b16 %v1704
        %v1883 = vunpack.c.h.b16 %v1704
        %v1884 = vunpack.c.l.b16 %v1705
        %v1885 = vunpack.c.h.b16 %v1705
        %v1886 = vunpack.c.l.b16 %v1706
        %v1887 = vunpack.c.h.b16 %v1706
        %v1888 = vunpack.c.l.b16 %v1707
        %v1889 = vunpack.c.h.b16 %v1707
        %v1890 = vunpack.c.l.b16 %v1708
        %v1891 = vunpack.c.h.b16 %v1708
        %v1892 = vunpack.c.l.b16 %v1709
        %v1893 = vunpack.c.h.b16 %v1709
        %v1894 = vunpack.c.l.b16 %v1710
        %v1895 = vunpack.c.h.b16 %v1710
        %v1896 = vunpack.c.l.b16 %v1711
        %v1897 = vunpack.c.h.b16 %v1711
        %v1898 = vunpack.c.l.b16 %v1712
        %v1899 = vunpack.c.h.b16 %v1712
        %v1900 = vunpack.c.l.b16 %v1713
        %v1901 = vunpack.c.h.b16 %v1713
        %v1902 = vunpack.c.l.b16 %v1714
        %v1903 = vunpack.c.h.b16 %v1714
        %v1904 = vunpack.c.l.b16 %v1715
        %v1905 = vunpack.c.h.b16 %v1715
        %v1906 = vunpack.c.l.b16 %v1716
        %v1907 = vunpack.c.h.b16 %v1716
        %v1908 = vunpack.c.l.b16 %v1717
        %v1909 = vunpack.c.h.b16 %v1717
        %v1910 = vunpack.c.l.b16 %v1718
        %v1911 = vunpack.c.h.b16 %v1718
        %v1912 = vunpack.c.l.b16 %v1719
        %v1913 = vunpack.c.h.b16 %v1719
        %v1914 = vunpack.c.l.b16 %v1720
        %v1915 = vunpack.c.h.b16 %v1720
        %v1916 = vunpack.c.l.b16 %v1721
        %v1917 = vunpack.c.h.b16 %v1721
        %v1918 = vunpack.c.l.b16 %v1722
        %v1919 = vunpack.c.h.b16 %v1722
        %v1920 = vunpack.c.l.b16 %v1723
        %v1921 = vunpack.c.h.b16 %v1723
        %v1922 = vunpack.c.l.b16 %v1724
        %v1923 = vunpack.c.h.b16 %v1724
        %v1924 = vunpack.c.l.b16 %v1725
        %v1925 = vunpack.c.h.b16 %v1725
        %v1926 = vunpack.c.l.b16 %v1726
        %v1927 = vunpack.c.h.b16 %v1726
        %v1928 = vunpack.c.l.b16 %v1727
        %v1929 = vunpack.c.h.b16 %v1727
        %v1930 = vunpack.c.l.b16 %v1728
        %v1931 = vunpack.c.h.b16 %v1728
        %v1932 = vunpack.c.l.b16 %v1729
        %v1933 = vunpack.c.h.b16 %v1729
        %v1934 = vunpack.c.l.b16 %v1730
        %v1935 = vunpack.c.h.b16 %v1730
        %v1936 = vunpack.c.l.b16 %v1731
        %v1937 = vunpack.c.h.b16 %v1731
        %v1938 = vunpack.c.l.b16 %v1732
        %v1939 = vunpack.c.h.b16 %v1732
        %v1940 = vunpack.c.l.b16 %v1733
        %v1941 = vunpack.c.h.b16 %v1733
        %v1942 = vunpack.c.l.b16 %v1734
        %v1943 = vunpack.c.h.b16 %v1734
        %v1944 = vunpack.c.l.b16 %v1735
        %v1945 = vunpack.c.h.b16 %v1735
        %v1946 = vunpack.c.l.b16 %v1736
        %v1947 = vunpack.c.h.b16 %v1736
        %v1948 = vunpack.c.l.b16 %v1737
        %v1949 = vunpack.c.h.b16 %v1737
        %v1950 = vunpack.c.l.b16 %v1738
        %v1951 = vunpack.c.h.b16 %v1738
        %v1952 = vunpack.c.l.b16 %v1739
        %v1953 = vunpack.c.h.b16 %v1739
        %v1954 = vunpack.c.l.b16 %v1740
        %v1955 = vunpack.c.h.b16 %v1740
        %v1956 = vunpack.c.l.b16 %v1741
        %v1957 = vunpack.c.h.b16 %v1741
        %v1958 = vunpack.c.l.b16 %v1742
        %v1959 = vunpack.c.h.b16 %v1742
        %v1960 = vunpack.c.l.b16 %v1743
        %v1961 = vunpack.c.h.b16 %v1743
        %v1962 = vunpack.c.l.b16 %v1744
        %v1963 = vunpack.c.h.b16 %v1744
        %v1964 = vunpack.c.l.b16 %v1745
        %v1965 = vunpack.c.h.b16 %v1745
        %v1966 = vunpack.c.l.b16 %v1746
        %v1967 = vunpack.c.h.b16 %v1746
        %v1968 = vunpack.c.l.b16 %v1747
        %v1969 = vunpack.c.h.b16 %v1747
        %v1970 = vunpack.c.l.b16 %v1748
        %v1971 = vunpack.c.h.b16 %v1748
        %v1972 = vunpack.c.l.b16 %v1749
        %v1973 = vunpack.c.h.b16 %v1749
        %v1974 = vunpack.c.l.b16 %v1750
        %v1975 = vunpack.c.h.b16 %v1750
        %v1976 = vunpack.c.l.b16 %v1751
        %v1977 = vunpack.c.h.b16 %v1751
        %v1978 = vunpack.c.l.b16 %v1752
        %v1979 = vunpack.c.h.b16 %v1752
        %v1980 = vunpack.c.l.b16 %v1753
        %v1981 = vunpack.c.h.b16 %v1753
        %v1982 = vunpack.c.l.b16 %v1754
        %v1983 = vunpack.c.h.b16 %v1754
        %v1984 = vunpack.c.l.b16 %v1755
        %v1985 = vunpack.c.h.b16 %v1755
        %v1986 = vunpack.c.l.b16 %v1756
        %v1987 = vunpack.c.h.b16 %v1756
        %v1988 = vunpack.c.l.b16 %v1757
        %v1989 = vunpack.c.h.b16 %v1757
        %v1990 = vunpack.c.l.b16 %v1758
        %v1991 = vunpack.c.h.b16 %v1758
        %v1992 = vunpack.c.l.b16 %v1759
        %v1993 = vunpack.c.h.b16 %v1759
        %v1994 = vunpack.c.l.b16 %v1760
        %v1995 = vunpack.c.h.b16 %v1760
        %v1996 = vpack.c.b16 %v1876, %v1868
        %v1997 = vpack.c.b16 %v1877, %v1869
        %v1998 = vpack.c.b16 %v1878, %v1870
        %v1999 = vpack.c.b16 %v1879, %v1871
        %v2000 = vpack.c.b16 %v1880, %v1872
        %v2001 = vpack.c.b16 %v1881, %v1873
        %v2002 = vpack.c.b16 %v1882, %v1874
        %v2003 = vpack.c.b16 %v1883, %v1875
        %v2004 = vpack.c.b16 %v1892, %v1884
        %v2005 = vpack.c.b16 %v1893, %v1885
        %v2006 = vpack.c.b16 %v1894, %v1886
        %v2007 = vpack.c.b16 %v1895, %v1887
        %v2008 = vpack.c.b16 %v1896, %v1888
        %v2009 = vpack.c.b16 %v1897, %v1889
        %v2010 = vpack.c.b16 %v1898, %v1890
        %v2011 = vpack.c.b16 %v1899, %v1891
        %v2012 = vpack.c.b16 %v1908, %v1900
        %v2013 = vpack.c.b16 %v1909, %v1901
        %v2014 = vpack.c.b16 %v1910, %v1902
        %v2015 = vpack.c.b16 %v1911, %v1903
        %v2016 = vpack.c.b16 %v1912, %v1904
        %v2017 = vpack.c.b16 %v1913, %v1905
        %v2018 = vpack.c.b16 %v1914, %v1906
        %v2019 = vpack.c.b16 %v1915, %v1907
        %v2020 = vpack.c.b16 %v1924, %v1916
        %v2021 = vpack.c.b16 %v1925, %v1917
        %v2022 = vpack.c.b16 %v1926, %v1918
        %v2023 = vpack.c.b16 %v1927, %v1919
        %v2024 = vpack.c.b16 %v1928, %v1920
        %v2025 = vpack.c.b16 %v1929, %v1921
        %v2026 = vpack.c.b16 %v1930, %v1922
        %v2027 = vpack.c.b16 %v1931, %v1923
        %v2028 = vpack.c.b16 %v1940, %v1932
        %v2029 = vpack.c.b16 %v1941, %v1933
        %v2030 = vpack.c.b16 %v1942, %v1934
        %v2031 = vpack.c.b16 %v1943, %v1935
        %v2032 = vpack.c.b16 %v1944, %v1936
        %v2033 = vpack.c.b16 %v1945, %v1937
        %v2034 = vpack.c.b16 %v1946, %v1938
        %v2035 = vpack.c.b16 %v1947, %v1939
        %v2036 = vpack.c.b16 %v1956, %v1948
        %v2037 = vpack.c.b16 %v1957, %v1949
        %v2038 = vpack.c.b16 %v1958, %v1950
        %v2039 = vpack.c.b16 %v1959, %v1951
        %v2040 = vpack.c.b16 %v1960, %v1952
        %v2041 = vpack.c.b16 %v1961, %v1953
        %v2042 = vpack.c.b16 %v1962, %v1954
        %v2043 = vpack.c.b16 %v1963, %v1955
        %v2044 = vpack.c.b16 %v1972, %v1964
        %v2045 = vpack.c.b16 %v1973, %v1965
        %v2046 = vpack.c.b16 %v1974, %v1966
        %v2047 = vpack.c.b16 %v1975, %v1967
        %v2048 = vpack.c.b16 %v1976, %v1968
        %v2049 = vpack.c.b16 %v1977, %v1969
        %v2050 = vpack.c.b16 %v1978, %v1970
        %v2051 = vpack.c.b16 %v1979, %v1971
        %v2052 = vpack.c.b16 %v1988, %v1980
        %v2053 = vpack.c.b16 %v1989, %v1981
        %v2054 = vpack.c.b16 %v1990, %v1982
        %v2055 = vpack.c.b16 %v1991, %v1983
        %v2056 = vpack.c.b16 %v1992, %v1984
        %v2057 = vpack.c.b16 %v1993, %v1985
        %v2058 = vpack.c.b16 %v1994, %v1986
        %v2059 = vpack.c.b16 %v1995, %v1987
        %2124 = vmatprep.subr.bf16.mxu0 %v1997
        %2125 = vmatpush1.bf16.msra.mxu0 %v1996
        %2126 = vmatprep.subr.bf16.mxu0 %v2005
        %2127 = vmatpush1.bf16.msra.mxu0 %v2004
        %2128 = vmatprep.subr.bf16.mxu0 %v2013
        %2129 = vmatpush1.bf16.msra.mxu0 %v2012
        %2130 = vmatprep.subr.bf16.mxu0 %v2021
        %2131 = vmatpush1.bf16.msra.mxu0 %v2020
        %2132 = vmatprep.subr.bf16.mxu0 %v2029
        %2133 = vmatpush1.bf16.msra.mxu0 %v2028
        %2134 = vmatprep.subr.bf16.mxu0 %v2037
        %2135 = vmatpush1.bf16.msra.mxu0 %v2036
        %2136 = vmatprep.subr.bf16.mxu0 %v2045
        %2137 = vmatpush1.bf16.msra.mxu0 %v2044
        %2138 = vmatprep.subr.bf16.mxu0 %v2053
        %2139 = vmatpush1.bf16.msra.mxu0 %v2052
        %2140 = vmatprep.subr.bf16.mxu0 0
        %2141 = vmatpush1.bf16.msra.mxu0 0
        %2142 = vmatprep.subr.bf16.mxu0 0
        %2143 = vmatpush1.bf16.msra.mxu0 0
        %2144 = vmatprep.subr.bf16.mxu0 0
        %2145 = vmatpush1.bf16.msra.mxu0 0
        %2146 = vmatprep.subr.bf16.mxu0 0
        %2147 = vmatpush1.bf16.msra.mxu0 0
        %2148 = vmatprep.subr.bf16.mxu0 0
        %2149 = vmatpush1.bf16.msra.mxu0 0
        %2150 = vmatprep.subr.bf16.mxu0 0
        %2151 = vmatpush1.bf16.msra.mxu0 0
        %2152 = vmatprep.subr.bf16.mxu0 0
        %2153 = vmatpush1.bf16.msra.mxu0 0
        %2154 = vmatprep.subr.bf16.mxu0 0
        %2155 = vmatpush1.bf16.msra.mxu0 0
        %2156 = vmatprep.mubr.bf16.mxu0 0
        %2157 = vmatmul.mubr.bf16.gmra.mrb[0].mxu0 %v353
        %v2158 = vpop.f32.mrb[0].mxu0
        %v2159 = vadd.f32 %v1767, %v2158
        %v2160 = vpop.f32.mrb[0].mxu0
        %v2161 = vadd.f32 %v1771, %v2160
        %v2162 = vpop.f32.mrb[0].mxu0
        %v2163 = vpop.f32.mrb[0].mxu0
        %2164 = vdwg.mxu0
        %2165 = vmatprep.subr.bf16.mxu0 %v1999
        %2166 = vmatpush1.bf16.msra.mxu0 %v1998
        %2167 = vmatprep.subr.bf16.mxu0 %v2007
        %2168 = vmatpush1.bf16.msra.mxu0 %v2006
        %2169 = vmatprep.subr.bf16.mxu0 %v2015
        %2170 = vmatpush1.bf16.msra.mxu0 %v2014
        %2171 = vmatprep.subr.bf16.mxu0 %v2023
        %2172 = vmatpush1.bf16.msra.mxu0 %v2022
        %2173 = vmatprep.subr.bf16.mxu0 %v2031
        %2174 = vmatpush1.bf16.msra.mxu0 %v2030
        %2175 = vmatprep.subr.bf16.mxu0 %v2039
        %2176 = vmatpush1.bf16.msra.mxu0 %v2038
        %2177 = vmatprep.subr.bf16.mxu0 %v2047
        %2178 = vmatpush1.bf16.msra.mxu0 %v2046
        %2179 = vmatprep.subr.bf16.mxu0 %v2055
        %2180 = vmatpush1.bf16.msra.mxu0 %v2054
        %2181 = vmatprep.subr.bf16.mxu0 0
        %2182 = vmatpush1.bf16.msra.mxu0 0
        %2183 = vmatprep.subr.bf16.mxu0 0
        %2184 = vmatpush1.bf16.msra.mxu0 0
        %2185 = vmatprep.subr.bf16.mxu0 0
        %2186 = vmatpush1.bf16.msra.mxu0 0
        %2187 = vmatprep.subr.bf16.mxu0 0
        %2188 = vmatpush1.bf16.msra.mxu0 0
        %2189 = vmatprep.subr.bf16.mxu0 0
        %2190 = vmatpush1.bf16.msra.mxu0 0
        %2191 = vmatprep.subr.bf16.mxu0 0
        %2192 = vmatpush1.bf16.msra.mxu0 0
        %2193 = vmatprep.subr.bf16.mxu0 0
        %2194 = vmatpush1.bf16.msra.mxu0 0
        %2195 = vmatprep.subr.bf16.mxu0 0
        %2196 = vmatpush1.bf16.msra.mxu0 0
        %2197 = vmatprep.mubr.bf16.mxu0 0
        %2198 = vmatmul.mubr.bf16.gmra.mrb[0].mxu0 %v353
        %v2199 = vpop.f32.mrb[0].mxu0
        %v2200 = vadd.f32 %v1775, %v2199
        %v2201 = vpop.f32.mrb[0].mxu0
        %v2202 = vadd.f32 %v1779, %v2201
        %v2203 = vpop.f32.mrb[0].mxu0
        %v2204 = vpop.f32.mrb[0].mxu0
        %2205 = vdwg.mxu0
        %2206 = vmatprep.subr.bf16.mxu0 %v2001
        %2207 = vmatpush1.bf16.msra.mxu0 %v2000
        %2208 = vmatprep.subr.bf16.mxu0 %v2009
        %2209 = vmatpush1.bf16.msra.mxu0 %v2008
        %2210 = vmatprep.subr.bf16.mxu0 %v2017
        %2211 = vmatpush1.bf16.msra.mxu0 %v2016
        %2212 = vmatprep.subr.bf16.mxu0 %v2025
        %2213 = vmatpush1.bf16.msra.mxu0 %v2024
        %2214 = vmatprep.subr.bf16.mxu0 %v2033
        %2215 = vmatpush1.bf16.msra.mxu0 %v2032
        %2216 = vmatprep.subr.bf16.mxu0 %v2041
        %2217 = vmatpush1.bf16.msra.mxu0 %v2040
        %2218 = vmatprep.subr.bf16.mxu0 %v2049
        %2219 = vmatpush1.bf16.msra.mxu0 %v2048
        %2220 = vmatprep.subr.bf16.mxu0 %v2057
        %2221 = vmatpush1.bf16.msra.mxu0 %v2056
        %2222 = vmatprep.subr.bf16.mxu0 0
        %2223 = vmatpush1.bf16.msra.mxu0 0
        %2224 = vmatprep.subr.bf16.mxu0 0
        %2225 = vmatpush1.bf16.msra.mxu0 0
        %2226 = vmatprep.subr.bf16.mxu0 0
        %2227 = vmatpush1.bf16.msra.mxu0 0
        %2228 = vmatprep.subr.bf16.mxu0 0
        %2229 = vmatpush1.bf16.msra.mxu0 0
        %2230 = vmatprep.subr.bf16.mxu0 0
        %2231 = vmatpush1.bf16.msra.mxu0 0
        %2232 = vmatprep.subr.bf16.mxu0 0
        %2233 = vmatpush1.bf16.msra.mxu0 0
        %2234 = vmatprep.subr.bf16.mxu0 0
        %2235 = vmatpush1.bf16.msra.mxu0 0
        %2236 = vmatprep.subr.bf16.mxu0 0
        %2237 = vmatpush1.bf16.msra.mxu0 0
        %2238 = vmatprep.mubr.bf16.mxu0 0
        %2239 = vmatmul.mubr.bf16.gmra.mrb[0].mxu0 %v353
        %v2240 = vpop.f32.mrb[0].mxu0
        %v2241 = vadd.f32 %v1783, %v2240
        %v2242 = vpop.f32.mrb[0].mxu0
        %v2243 = vadd.f32 %v1787, %v2242
        %v2244 = vpop.f32.mrb[0].mxu0
        %v2245 = vpop.f32.mrb[0].mxu0
        %2246 = vdwg.mxu0
        %2247 = vmatprep.subr.bf16.mxu0 %v2003
        %2248 = vmatpush1.bf16.msra.mxu0 %v2002
        %2249 = vmatprep.subr.bf16.mxu0 %v2011
        %2250 = vmatpush1.bf16.msra.mxu0 %v2010
        %2251 = vmatprep.subr.bf16.mxu0 %v2019
        %2252 = vmatpush1.bf16.msra.mxu0 %v2018
        %2253 = vmatprep.subr.bf16.mxu0 %v2027
        %2254 = vmatpush1.bf16.msra.mxu0 %v2026
        %2255 = vmatprep.subr.bf16.mxu0 %v2035
        %2256 = vmatpush1.bf16.msra.mxu0 %v2034
        %2257 = vmatprep.subr.bf16.mxu0 %v2043
        %2258 = vmatpush1.bf16.msra.mxu0 %v2042
        %2259 = vmatprep.subr.bf16.mxu0 %v2051
        %2260 = vmatpush1.bf16.msra.mxu0 %v2050
        %2261 = vmatprep.subr.bf16.mxu0 %v2059
        %2262 = vmatpush1.bf16.msra.mxu0 %v2058
        %2263 = vmatprep.subr.bf16.mxu0 0
        %2264 = vmatpush1.bf16.msra.mxu0 0
        %2265 = vmatprep.subr.bf16.mxu0 0
        %2266 = vmatpush1.bf16.msra.mxu0 0
        %2267 = vmatprep.subr.bf16.mxu0 0
        %2268 = vmatpush1.bf16.msra.mxu0 0
        %2269 = vmatprep.subr.bf16.mxu0 0
        %2270 = vmatpush1.bf16.msra.mxu0 0
        %2271 = vmatprep.subr.bf16.mxu0 0
        %2272 = vmatpush1.bf16.msra.mxu0 0
        %2273 = vmatprep.subr.bf16.mxu0 0
        %2274 = vmatpush1.bf16.msra.mxu0 0
        %2275 = vmatprep.subr.bf16.mxu0 0
        %2276 = vmatpush1.bf16.msra.mxu0 0
        %2277 = vmatprep.subr.bf16.mxu0 0
        %2278 = vmatpush1.bf16.msra.mxu0 0
        %2279 = vmatprep.mubr.bf16.mxu0 0
        %2280 = vmatmul.mubr.bf16.gmra.mrb[0].mxu0 %v353
        %v2281 = vpop.f32.mrb[0].mxu0
        %v2282 = vadd.f32 %v1791, %v2281
        %v2283 = vpop.f32.mrb[0].mxu0
        %v2284 = vadd.f32 %v1795, %v2283
        %v2285 = vpop.f32.mrb[0].mxu0
        %v2286 = vpop.f32.mrb[0].mxu0
        %2287 = vdwg.mxu0
        %v2296 = vcombine.low %v2159, %v2161
        %v2297 = vcombine.low %v2200, %v2202
        %v2298 = vcombine.low %v2241, %v2243
        %v2299 = vcombine.low %v2282, %v2284
        %v2301 = vunpack.c.l.s4 1966171168
        %v2302 = vunpack.c.0.s8 %v2301
        %v2303 = vlaneseq
        %v2304 = vshrl.u32 %v2303, 7
        %v2305 = vsub.s32 %v2302, %v2304
        %v2306 = vrot.slane %v2296, %v2305
        %v2308 = vunpack.c.l.s4 1966171168
        %v2309 = vunpack.c.0.s8 %v2308
        %v2310 = vlaneseq
        %v2311 = vshrl.u32 %v2310, 7
        %v2312 = vsub.s32 %v2309, %v2311
        %v2313 = vrot.slane %v2297, %v2312
        %v2315 = vunpack.c.l.s4 1966171168
        %v2316 = vunpack.c.0.s8 %v2315
        %v2317 = vlaneseq
        %v2318 = vshrl.u32 %v2317, 7
        %v2319 = vsub.s32 %v2316, %v2318
        %v2320 = vrot.slane %v2298, %v2319
        %v2322 = vunpack.c.l.s4 1966171168
        %v2323 = vunpack.c.0.s8 %v2322
        %v2324 = vlaneseq
        %v2325 = vshrl.u32 %v2324, 7
        %v2326 = vsub.s32 %v2323, %v2325
        %v2327 = vrot.slane %v2299, %v2326
        %v2328 = vcombine.low %v2306, %v2313
        %v2329 = vcombine.high %v2306, %v2313
        %v2330 = vcombine.low %v2320, %v2327
        %v2331 = vcombine.high %v2320, %v2327
        %v2333 = vunpack.c.l.s4 1966171168
        %v2334 = vunpack.c.0.s8 %v2333
        %v2335 = vlaneseq
        %v2336 = vshrl.u32 %v2335, 7
        %v2337 = vsub.s32 %v2334, %v2336
        %v2338 = vrot.slane %v2328, %v2337
        %v2340 = vunpack.c.l.s4 1966171168
        %v2341 = vunpack.c.0.s8 %v2340
        %v2342 = vlaneseq
        %v2343 = vshrl.u32 %v2342, 7
        %v2344 = vsub.s32 %v2341, %v2343
        %v2345 = vrot.slane %v2329, %v2344
        %v2347 = vunpack.c.l.s4 1966171168
        %v2348 = vunpack.c.0.s8 %v2347
        %v2349 = vlaneseq
        %v2350 = vshrl.u32 %v2349, 7
        %v2351 = vsub.s32 %v2348, %v2350
        %v2352 = vrot.slane %v2330, %v2351
        %v2354 = vunpack.c.l.s4 1966171168
        %v2355 = vunpack.c.0.s8 %v2354
        %v2356 = vlaneseq
        %v2357 = vshrl.u32 %v2356, 7
        %v2358 = vsub.s32 %v2355, %v2357
        %v2359 = vrot.slane %v2331, %v2358
        %v2360 = vcombine.low %v2338, %v2352
        %v2361 = vcombine.low %v2345, %v2359
        %s2364 = scalar_lea.vmem %s331, 2 [#allocation9]
        %2365 = vst [vmem:[%s2364] ss:$4 sm:$0xff] %v2360
        %s2366 = scalar_lea.vmem %s331, 34 [#allocation9]
        %2367 = vst [vmem:[%s2366] ss:$4 sm:$0xff] %v2361
        %2369 = vset.pattern.permute.xlu0 0
        %2370 = vperm.xlu0 %2369, %v354
        %v2371 = vpop.permute.xlu0 %2370
        %v2373 = vmul.f32 %v2371, %v816
        %v2374 = vmul.f32 %v2371, %v818
        %v2375 = vmul.f32 %v2371, %v857
        %v2376 = vmul.f32 %v2371, %v859
        %v2377 = vmul.f32 %v2371, %v898
        %v2378 = vmul.f32 %v2371, %v900
        %v2379 = vmul.f32 %v2371, %v939
        %v2380 = vmul.f32 %v2371, %v941
        %2381 = vset.pattern.permute.xlu0 1
        %2382 = vperm.xlu0 %2381, %v354
        %v2383 = vpop.permute.xlu0 %2382
        %v2385 = vmul.f32 %v2383, %v1487
        %v2386 = vmul.f32 %v2383, %v1489
        %v2387 = vmul.f32 %v2383, %v1528
        %v2388 = vmul.f32 %v2383, %v1530
        %v2389 = vmul.f32 %v2383, %v1569
        %v2390 = vmul.f32 %v2383, %v1571
        %v2391 = vmul.f32 %v2383, %v1610
        %v2392 = vmul.f32 %v2383, %v1612
        %v2393 = vadd.f32 %v2373, %v2385
        %v2394 = vadd.f32 %v2374, %v2386
        %v2395 = vadd.f32 %v2375, %v2387
        %v2396 = vadd.f32 %v2376, %v2388
        %v2397 = vadd.f32 %v2377, %v2389
        %v2398 = vadd.f32 %v2378, %v2390
        %v2399 = vadd.f32 %v2379, %v2391
        %v2400 = vadd.f32 %v2380, %v2392
        %2401 = vset.pattern.permute.xlu0 2
        %2402 = vperm.xlu0 %2401, %v354
        %v2403 = vpop.permute.xlu0 %2402
        %v2405 = vmul.f32 %v2403, %v2159
        %v2406 = vmul.f32 %v2403, %v2161
        %v2407 = vmul.f32 %v2403, %v2200
        %v2408 = vmul.f32 %v2403, %v2202
        %v2409 = vmul.f32 %v2403, %v2241
        %v2410 = vmul.f32 %v2403, %v2243
        %v2411 = vmul.f32 %v2403, %v2282
        %v2412 = vmul.f32 %v2403, %v2284
        %v2413 = vadd.f32 %v2393, %v2405
        %v2414 = vadd.f32 %v2394, %v2406
        %v2415 = vadd.f32 %v2395, %v2407
        %v2416 = vadd.f32 %v2396, %v2408
        %v2417 = vadd.f32 %v2397, %v2409
        %v2418 = vadd.f32 %v2398, %v2410
        %v2419 = vadd.f32 %v2399, %v2411
        %v2420 = vadd.f32 %v2400, %v2412
        %v2429 = vcombine.low %v2413, %v2414
        %v2430 = vcombine.low %v2415, %v2416
        %v2431 = vcombine.low %v2417, %v2418
        %v2432 = vcombine.low %v2419, %v2420
        %v2434 = vunpack.c.l.s4 1966171168
        %v2435 = vunpack.c.0.s8 %v2434
        %v2436 = vlaneseq
        %v2437 = vshrl.u32 %v2436, 7
        %v2438 = vsub.s32 %v2435, %v2437
        %v2439 = vrot.slane %v2429, %v2438
        %v2441 = vunpack.c.l.s4 1966171168
        %v2442 = vunpack.c.0.s8 %v2441
        %v2443 = vlaneseq
        %v2444 = vshrl.u32 %v2443, 7
        %v2445 = vsub.s32 %v2442, %v2444
        %v2446 = vrot.slane %v2430, %v2445
        %v2448 = vunpack.c.l.s4 1966171168
        %v2449 = vunpack.c.0.s8 %v2448
        %v2450 = vlaneseq
        %v2451 = vshrl.u32 %v2450, 7
        %v2452 = vsub.s32 %v2449, %v2451
        %v2453 = vrot.slane %v2431, %v2452
        %v2455 = vunpack.c.l.s4 1966171168
        %v2456 = vunpack.c.0.s8 %v2455
        %v2457 = vlaneseq
        %v2458 = vshrl.u32 %v2457, 7
        %v2459 = vsub.s32 %v2456, %v2458
        %v2460 = vrot.slane %v2432, %v2459
        %v2461 = vcombine.low %v2439, %v2446
        %v2462 = vcombine.high %v2439, %v2446
        %v2463 = vcombine.low %v2453, %v2460
        %v2464 = vcombine.high %v2453, %v2460
        %v2466 = vunpack.c.l.s4 1966171168
        %v2467 = vunpack.c.0.s8 %v2466
        %v2468 = vlaneseq
        %v2469 = vshrl.u32 %v2468, 7
        %v2470 = vsub.s32 %v2467, %v2469
        %v2471 = vrot.slane %v2461, %v2470
        %v2473 = vunpack.c.l.s4 1966171168
        %v2474 = vunpack.c.0.s8 %v2473
        %v2475 = vlaneseq
        %v2476 = vshrl.u32 %v2475, 7
        %v2477 = vsub.s32 %v2474, %v2476
        %v2478 = vrot.slane %v2462, %v2477
        %v2480 = vunpack.c.l.s4 1966171168
        %v2481 = vunpack.c.0.s8 %v2480
        %v2482 = vlaneseq
        %v2483 = vshrl.u32 %v2482, 7
        %v2484 = vsub.s32 %v2481, %v2483
        %v2485 = vrot.slane %v2463, %v2484
        %v2487 = vunpack.c.l.s4 1966171168
        %v2488 = vunpack.c.0.s8 %v2487
        %v2489 = vlaneseq
        %v2490 = vshrl.u32 %v2489, 7
        %v2491 = vsub.s32 %v2488, %v2490
        %v2492 = vrot.slane %v2464, %v2491
        %v2493 = vcombine.low %v2471, %v2485
        %v2494 = vcombine.low %v2478, %v2492
        %2497 = vst [vmem:[%s338] ss:$4 sm:$0xff] %v2493
        %s2498 = scalar_lea.vmem %s338, 32 [#allocation10]
        %2499 = vst [vmem:[%s2498] ss:$4 sm:$0xff] %v2494
        %2500 = vset.pattern.permute.xlu0 9
        %2501 = vperm.xlu0 %2500, %v354
        %v2502 = vpop.permute.xlu0 %2501
        %v2504 = vmul.f32 %v2502, %v2413
        %v2505 = vmul.f32 %v2502, %v2414
        %v2506 = vmul.f32 %v2502, %v2415
        %v2507 = vmul.f32 %v2502, %v2416
        %v2508 = vmul.f32 %v2502, %v2417
        %v2509 = vmul.f32 %v2502, %v2418
        %v2510 = vmul.f32 %v2502, %v2419
        %v2511 = vmul.f32 %v2502, %v2420
        %2512 = vset.pattern.permute.xlu0 10
        %2513 = vperm.xlu0 %2512, %v354
        %v2514 = vpop.permute.xlu0 %2513
        %v2516 = vadd.f32 %v2504, %v2514
        %v2517 = vadd.f32 %v2505, %v2514
        %v2518 = vadd.f32 %v2506, %v2514
        %v2519 = vadd.f32 %v2507, %v2514
        %v2520 = vadd.f32 %v2508, %v2514
        %v2521 = vadd.f32 %v2509, %v2514
        %v2522 = vadd.f32 %v2510, %v2514
        %v2523 = vadd.f32 %v2511, %v2514
        %v2532 = vcombine.low %v2516, %v2517
        %v2533 = vcombine.low %v2518, %v2519
        %v2534 = vcombine.low %v2520, %v2521
        %v2535 = vcombine.low %v2522, %v2523
        %v2537 = vunpack.c.l.s4 1966171168
        %v2538 = vunpack.c.0.s8 %v2537
        %v2539 = vlaneseq
        %v2540 = vshrl.u32 %v2539, 7
        %v2541 = vsub.s32 %v2538, %v2540
        %v2542 = vrot.slane %v2532, %v2541
        %v2544 = vunpack.c.l.s4 1966171168
        %v2545 = vunpack.c.0.s8 %v2544
        %v2546 = vlaneseq
        %v2547 = vshrl.u32 %v2546, 7
        %v2548 = vsub.s32 %v2545, %v2547
        %v2549 = vrot.slane %v2533, %v2548
        %v2551 = vunpack.c.l.s4 1966171168
        %v2552 = vunpack.c.0.s8 %v2551
        %v2553 = vlaneseq
        %v2554 = vshrl.u32 %v2553, 7
        %v2555 = vsub.s32 %v2552, %v2554
        %v2556 = vrot.slane %v2534, %v2555
        %v2558 = vunpack.c.l.s4 1966171168
        %v2559 = vunpack.c.0.s8 %v2558
        %v2560 = vlaneseq
        %v2561 = vshrl.u32 %v2560, 7
        %v2562 = vsub.s32 %v2559, %v2561
        %v2563 = vrot.slane %v2535, %v2562
        %v2564 = vcombine.low %v2542, %v2549
        %v2565 = vcombine.high %v2542, %v2549
        %v2566 = vcombine.low %v2556, %v2563
        %v2567 = vcombine.high %v2556, %v2563
        %v2569 = vunpack.c.l.s4 1966171168
        %v2570 = vunpack.c.0.s8 %v2569
        %v2571 = vlaneseq
        %v2572 = vshrl.u32 %v2571, 7
        %v2573 = vsub.s32 %v2570, %v2572
        %v2574 = vrot.slane %v2564, %v2573
        %v2576 = vunpack.c.l.s4 1966171168
        %v2577 = vunpack.c.0.s8 %v2576
        %v2578 = vlaneseq
        %v2579 = vshrl.u32 %v2578, 7
        %v2580 = vsub.s32 %v2577, %v2579
        %v2581 = vrot.slane %v2565, %v2580
        %v2583 = vunpack.c.l.s4 1966171168
        %v2584 = vunpack.c.0.s8 %v2583
        %v2585 = vlaneseq
        %v2586 = vshrl.u32 %v2585, 7
        %v2587 = vsub.s32 %v2584, %v2586
        %v2588 = vrot.slane %v2566, %v2587
        %v2590 = vunpack.c.l.s4 1966171168
        %v2591 = vunpack.c.0.s8 %v2590
        %v2592 = vlaneseq
        %v2593 = vshrl.u32 %v2592, 7
        %v2594 = vsub.s32 %v2591, %v2593
        %v2595 = vrot.slane %v2567, %v2594
        %v2596 = vcombine.low %v2574, %v2588
        %v2597 = vcombine.low %v2581, %v2595
        %2600 = vst [vmem:[%s345] ss:$4 sm:$0xff] %v2596
        %s2601 = scalar_lea.vmem %s345, 32 [#allocation12]
        %2602 = vst [vmem:[%s2601] ss:$4 sm:$0xff] %v2597
        %2603 = vset.pattern.permute.xlu0 3
        %2604 = vperm.xlu0 %2603, %v354
        %v2605 = vpop.permute.xlu0 %2604
        %v2607 = vmul.f32 %v2605, %v816
        %v2608 = vmul.f32 %v2605, %v818
        %v2609 = vmul.f32 %v2605, %v857
        %v2610 = vmul.f32 %v2605, %v859
        %v2611 = vmul.f32 %v2605, %v898
        %v2612 = vmul.f32 %v2605, %v900
        %v2613 = vmul.f32 %v2605, %v939
        %v2614 = vmul.f32 %v2605, %v941
        %2615 = vset.pattern.permute.xlu0 4
        %2616 = vperm.xlu0 %2615, %v354
        %v2617 = vpop.permute.xlu0 %2616
        %v2619 = vmul.f32 %v2617, %v1487
        %v2620 = vmul.f32 %v2617, %v1489
        %v2621 = vmul.f32 %v2617, %v1528
        %v2622 = vmul.f32 %v2617, %v1530
        %v2623 = vmul.f32 %v2617, %v1569
        %v2624 = vmul.f32 %v2617, %v1571
        %v2625 = vmul.f32 %v2617, %v1610
        %v2626 = vmul.f32 %v2617, %v1612
        %v2627 = vadd.f32 %v2607, %v2619
        %v2628 = vadd.f32 %v2608, %v2620
        %v2629 = vadd.f32 %v2609, %v2621
        %v2630 = vadd.f32 %v2610, %v2622
        %v2631 = vadd.f32 %v2611, %v2623
        %v2632 = vadd.f32 %v2612, %v2624
        %v2633 = vadd.f32 %v2613, %v2625
        %v2634 = vadd.f32 %v2614, %v2626
        %2635 = vset.pattern.permute.xlu0 5
        %2636 = vperm.xlu0 %2635, %v354
        %v2637 = vpop.permute.xlu0 %2636
        %v2639 = vmul.f32 %v2637, %v2159
        %v2640 = vmul.f32 %v2637, %v2161
        %v2641 = vmul.f32 %v2637, %v2200
        %v2642 = vmul.f32 %v2637, %v2202
        %v2643 = vmul.f32 %v2637, %v2241
        %v2644 = vmul.f32 %v2637, %v2243
        %v2645 = vmul.f32 %v2637, %v2282
        %v2646 = vmul.f32 %v2637, %v2284
        %v2647 = vadd.f32 %v2627, %v2639
        %v2648 = vadd.f32 %v2628, %v2640
        %v2649 = vadd.f32 %v2629, %v2641
        %v2650 = vadd.f32 %v2630, %v2642
        %v2651 = vadd.f32 %v2631, %v2643
        %v2652 = vadd.f32 %v2632, %v2644
        %v2653 = vadd.f32 %v2633, %v2645
        %v2654 = vadd.f32 %v2634, %v2646
        %v2663 = vcombine.low %v2647, %v2648
        %v2664 = vcombine.low %v2649, %v2650
        %v2665 = vcombine.low %v2651, %v2652
        %v2666 = vcombine.low %v2653, %v2654
        %v2668 = vunpack.c.l.s4 1966171168
        %v2669 = vunpack.c.0.s8 %v2668
        %v2670 = vlaneseq
        %v2671 = vshrl.u32 %v2670, 7
        %v2672 = vsub.s32 %v2669, %v2671
        %v2673 = vrot.slane %v2663, %v2672
        %v2675 = vunpack.c.l.s4 1966171168
        %v2676 = vunpack.c.0.s8 %v2675
        %v2677 = vlaneseq
        %v2678 = vshrl.u32 %v2677, 7
        %v2679 = vsub.s32 %v2676, %v2678
        %v2680 = vrot.slane %v2664, %v2679
        %v2682 = vunpack.c.l.s4 1966171168
        %v2683 = vunpack.c.0.s8 %v2682
        %v2684 = vlaneseq
        %v2685 = vshrl.u32 %v2684, 7
        %v2686 = vsub.s32 %v2683, %v2685
        %v2687 = vrot.slane %v2665, %v2686
        %v2689 = vunpack.c.l.s4 1966171168
        %v2690 = vunpack.c.0.s8 %v2689
        %v2691 = vlaneseq
        %v2692 = vshrl.u32 %v2691, 7
        %v2693 = vsub.s32 %v2690, %v2692
        %v2694 = vrot.slane %v2666, %v2693
        %v2695 = vcombine.low %v2673, %v2680
        %v2696 = vcombine.high %v2673, %v2680
        %v2697 = vcombine.low %v2687, %v2694
        %v2698 = vcombine.high %v2687, %v2694
        %v2700 = vunpack.c.l.s4 1966171168
        %v2701 = vunpack.c.0.s8 %v2700
        %v2702 = vlaneseq
        %v2703 = vshrl.u32 %v2702, 7
        %v2704 = vsub.s32 %v2701, %v2703
        %v2705 = vrot.slane %v2695, %v2704
        %v2707 = vunpack.c.l.s4 1966171168
        %v2708 = vunpack.c.0.s8 %v2707
        %v2709 = vlaneseq
        %v2710 = vshrl.u32 %v2709, 7
        %v2711 = vsub.s32 %v2708, %v2710
        %v2712 = vrot.slane %v2696, %v2711
        %v2714 = vunpack.c.l.s4 1966171168
        %v2715 = vunpack.c.0.s8 %v2714
        %v2716 = vlaneseq
        %v2717 = vshrl.u32 %v2716, 7
        %v2718 = vsub.s32 %v2715, %v2717
        %v2719 = vrot.slane %v2697, %v2718
        %v2721 = vunpack.c.l.s4 1966171168
        %v2722 = vunpack.c.0.s8 %v2721
        %v2723 = vlaneseq
        %v2724 = vshrl.u32 %v2723, 7
        %v2725 = vsub.s32 %v2722, %v2724
        %v2726 = vrot.slane %v2698, %v2725
        %v2727 = vcombine.low %v2705, %v2719
        %v2728 = vcombine.low %v2712, %v2726
        %s2731 = scalar_lea.vmem %s338, 1 [#allocation10]
        %2732 = vst [vmem:[%s2731] ss:$4 sm:$0xff] %v2727
        %s2733 = scalar_lea.vmem %s338, 33 [#allocation10]
        %2734 = vst [vmem:[%s2733] ss:$4 sm:$0xff] %v2728
        %v2735 = vmul.f32 %v2502, %v2647
        %v2736 = vmul.f32 %v2502, %v2648
        %v2737 = vmul.f32 %v2502, %v2649
        %v2738 = vmul.f32 %v2502, %v2650
        %v2739 = vmul.f32 %v2502, %v2651
        %v2740 = vmul.f32 %v2502, %v2652
        %v2741 = vmul.f32 %v2502, %v2653
        %v2742 = vmul.f32 %v2502, %v2654
        %2743 = vset.pattern.permute.xlu0 11
        %2744 = vperm.xlu0 %2743, %v354
        %v2745 = vpop.permute.xlu0 %2744
        %v2747 = vadd.f32 %v2735, %v2745
        %v2748 = vadd.f32 %v2736, %v2745
        %v2749 = vadd.f32 %v2737, %v2745
        %v2750 = vadd.f32 %v2738, %v2745
        %v2751 = vadd.f32 %v2739, %v2745
        %v2752 = vadd.f32 %v2740, %v2745
        %v2753 = vadd.f32 %v2741, %v2745
        %v2754 = vadd.f32 %v2742, %v2745
        %v2763 = vcombine.low %v2747, %v2748
        %v2764 = vcombine.low %v2749, %v2750
        %v2765 = vcombine.low %v2751, %v2752
        %v2766 = vcombine.low %v2753, %v2754
        %v2768 = vunpack.c.l.s4 1966171168
        %v2769 = vunpack.c.0.s8 %v2768
        %v2770 = vlaneseq
        %v2771 = vshrl.u32 %v2770, 7
        %v2772 = vsub.s32 %v2769, %v2771
        %v2773 = vrot.slane %v2763, %v2772
        %v2775 = vunpack.c.l.s4 1966171168
        %v2776 = vunpack.c.0.s8 %v2775
        %v2777 = vlaneseq
        %v2778 = vshrl.u32 %v2777, 7
        %v2779 = vsub.s32 %v2776, %v2778
        %v2780 = vrot.slane %v2764, %v2779
        %v2782 = vunpack.c.l.s4 1966171168
        %v2783 = vunpack.c.0.s8 %v2782
        %v2784 = vlaneseq
        %v2785 = vshrl.u32 %v2784, 7
        %v2786 = vsub.s32 %v2783, %v2785
        %v2787 = vrot.slane %v2765, %v2786
        %v2789 = vunpack.c.l.s4 1966171168
        %v2790 = vunpack.c.0.s8 %v2789
        %v2791 = vlaneseq
        %v2792 = vshrl.u32 %v2791, 7
        %v2793 = vsub.s32 %v2790, %v2792
        %v2794 = vrot.slane %v2766, %v2793
        %v2795 = vcombine.low %v2773, %v2780
        %v2796 = vcombine.high %v2773, %v2780
        %v2797 = vcombine.low %v2787, %v2794
        %v2798 = vcombine.high %v2787, %v2794
        %v2800 = vunpack.c.l.s4 1966171168
        %v2801 = vunpack.c.0.s8 %v2800
        %v2802 = vlaneseq
        %v2803 = vshrl.u32 %v2802, 7
        %v2804 = vsub.s32 %v2801, %v2803
        %v2805 = vrot.slane %v2795, %v2804
        %v2807 = vunpack.c.l.s4 1966171168
        %v2808 = vunpack.c.0.s8 %v2807
        %v2809 = vlaneseq
        %v2810 = vshrl.u32 %v2809, 7
        %v2811 = vsub.s32 %v2808, %v2810
        %v2812 = vrot.slane %v2796, %v2811
        %v2814 = vunpack.c.l.s4 1966171168
        %v2815 = vunpack.c.0.s8 %v2814
        %v2816 = vlaneseq
        %v2817 = vshrl.u32 %v2816, 7
        %v2818 = vsub.s32 %v2815, %v2817
        %v2819 = vrot.slane %v2797, %v2818
        %v2821 = vunpack.c.l.s4 1966171168
        %v2822 = vunpack.c.0.s8 %v2821
        %v2823 = vlaneseq
        %v2824 = vshrl.u32 %v2823, 7
        %v2825 = vsub.s32 %v2822, %v2824
        %v2826 = vrot.slane %v2798, %v2825
        %v2827 = vcombine.low %v2805, %v2819
        %v2828 = vcombine.low %v2812, %v2826
        %s2831 = scalar_lea.vmem %s345, 1 [#allocation12]
        %2832 = vst [vmem:[%s2831] ss:$4 sm:$0xff] %v2827
        %s2833 = scalar_lea.vmem %s345, 33 [#allocation12]
        %2834 = vst [vmem:[%s2833] ss:$4 sm:$0xff] %v2828
        %2835 = vset.pattern.permute.xlu0 6
        %2836 = vperm.xlu0 %2835, %v354
        %v2837 = vpop.permute.xlu0 %2836
        %v2839 = vmul.f32 %v2837, %v816
        %v2840 = vmul.f32 %v2837, %v818
        %v2841 = vmul.f32 %v2837, %v857
        %v2842 = vmul.f32 %v2837, %v859
        %v2843 = vmul.f32 %v2837, %v898
        %v2844 = vmul.f32 %v2837, %v900
        %v2845 = vmul.f32 %v2837, %v939
        %v2846 = vmul.f32 %v2837, %v941
        %2847 = vset.pattern.permute.xlu0 7
        %2848 = vperm.xlu0 %2847, %v354
        %v2849 = vpop.permute.xlu0 %2848
        %v2851 = vmul.f32 %v2849, %v1487
        %v2852 = vmul.f32 %v2849, %v1489
        %v2853 = vmul.f32 %v2849, %v1528
        %v2854 = vmul.f32 %v2849, %v1530
        %v2855 = vmul.f32 %v2849, %v1569
        %v2856 = vmul.f32 %v2849, %v1571
        %v2857 = vmul.f32 %v2849, %v1610
        %v2858 = vmul.f32 %v2849, %v1612
        %v2859 = vadd.f32 %v2839, %v2851
        %v2860 = vadd.f32 %v2840, %v2852
        %v2861 = vadd.f32 %v2841, %v2853
        %v2862 = vadd.f32 %v2842, %v2854
        %v2863 = vadd.f32 %v2843, %v2855
        %v2864 = vadd.f32 %v2844, %v2856
        %v2865 = vadd.f32 %v2845, %v2857
        %v2866 = vadd.f32 %v2846, %v2858
        %2867 = vset.pattern.permute.xlu0 8
        %2868 = vperm.xlu0 %2867, %v354
        %v2869 = vpop.permute.xlu0 %2868
        %v2871 = vmul.f32 %v2869, %v2159
        %v2872 = vmul.f32 %v2869, %v2161
        %v2873 = vmul.f32 %v2869, %v2200
        %v2874 = vmul.f32 %v2869, %v2202
        %v2875 = vmul.f32 %v2869, %v2241
        %v2876 = vmul.f32 %v2869, %v2243
        %v2877 = vmul.f32 %v2869, %v2282
        %v2878 = vmul.f32 %v2869, %v2284
        %v2879 = vadd.f32 %v2859, %v2871
        %v2880 = vadd.f32 %v2860, %v2872
        %v2881 = vadd.f32 %v2861, %v2873
        %v2882 = vadd.f32 %v2862, %v2874
        %v2883 = vadd.f32 %v2863, %v2875
        %v2884 = vadd.f32 %v2864, %v2876
        %v2885 = vadd.f32 %v2865, %v2877
        %v2886 = vadd.f32 %v2866, %v2878
        %v2895 = vcombine.low %v2879, %v2880
        %v2896 = vcombine.low %v2881, %v2882
        %v2897 = vcombine.low %v2883, %v2884
        %v2898 = vcombine.low %v2885, %v2886
        %v2900 = vunpack.c.l.s4 1966171168
        %v2901 = vunpack.c.0.s8 %v2900
        %v2902 = vlaneseq
        %v2903 = vshrl.u32 %v2902, 7
        %v2904 = vsub.s32 %v2901, %v2903
        %v2905 = vrot.slane %v2895, %v2904
        %v2907 = vunpack.c.l.s4 1966171168
        %v2908 = vunpack.c.0.s8 %v2907
        %v2909 = vlaneseq
        %v2910 = vshrl.u32 %v2909, 7
        %v2911 = vsub.s32 %v2908, %v2910
        %v2912 = vrot.slane %v2896, %v2911
        %v2914 = vunpack.c.l.s4 1966171168
        %v2915 = vunpack.c.0.s8 %v2914
        %v2916 = vlaneseq
        %v2917 = vshrl.u32 %v2916, 7
        %v2918 = vsub.s32 %v2915, %v2917
        %v2919 = vrot.slane %v2897, %v2918
        %v2921 = vunpack.c.l.s4 1966171168
        %v2922 = vunpack.c.0.s8 %v2921
        %v2923 = vlaneseq
        %v2924 = vshrl.u32 %v2923, 7
        %v2925 = vsub.s32 %v2922, %v2924
        %v2926 = vrot.slane %v2898, %v2925
        %v2927 = vcombine.low %v2905, %v2912
        %v2928 = vcombine.high %v2905, %v2912
        %v2929 = vcombine.low %v2919, %v2926
        %v2930 = vcombine.high %v2919, %v2926
        %v2932 = vunpack.c.l.s4 1966171168
        %v2933 = vunpack.c.0.s8 %v2932
        %v2934 = vlaneseq
        %v2935 = vshrl.u32 %v2934, 7
        %v2936 = vsub.s32 %v2933, %v2935
        %v2937 = vrot.slane %v2927, %v2936
        %v2939 = vunpack.c.l.s4 1966171168
        %v2940 = vunpack.c.0.s8 %v2939
        %v2941 = vlaneseq
        %v2942 = vshrl.u32 %v2941, 7
        %v2943 = vsub.s32 %v2940, %v2942
        %v2944 = vrot.slane %v2928, %v2943
        %v2946 = vunpack.c.l.s4 1966171168
        %v2947 = vunpack.c.0.s8 %v2946
        %v2948 = vlaneseq
        %v2949 = vshrl.u32 %v2948, 7
        %v2950 = vsub.s32 %v2947, %v2949
        %v2951 = vrot.slane %v2929, %v2950
        %v2953 = vunpack.c.l.s4 1966171168
        %v2954 = vunpack.c.0.s8 %v2953
        %v2955 = vlaneseq
        %v2956 = vshrl.u32 %v2955, 7
        %v2957 = vsub.s32 %v2954, %v2956
        %v2958 = vrot.slane %v2930, %v2957
        %v2959 = vcombine.low %v2937, %v2951
        %v2960 = vcombine.low %v2944, %v2958
        %s2963 = scalar_lea.vmem %s338, 2 [#allocation10]
        %2964 = vst [vmem:[%s2963] ss:$4 sm:$0xff] %v2959
        %s2965 = scalar_lea.vmem %s338, 34 [#allocation10]
        %2966 = vst [vmem:[%s2965] ss:$4 sm:$0xff] %v2960
        %v2967 = vmul.f32 %v2502, %v2879
        %v2968 = vmul.f32 %v2502, %v2880
        %v2969 = vmul.f32 %v2502, %v2881
        %v2970 = vmul.f32 %v2502, %v2882
        %v2971 = vmul.f32 %v2502, %v2883
        %v2972 = vmul.f32 %v2502, %v2884
        %v2973 = vmul.f32 %v2502, %v2885
        %v2974 = vmul.f32 %v2502, %v2886
        %v2983 = vcombine.low %v2967, %v2968
        %v2984 = vcombine.low %v2969, %v2970
        %v2985 = vcombine.low %v2971, %v2972
        %v2986 = vcombine.low %v2973, %v2974
        %v2988 = vunpack.c.l.s4 1966171168
        %v2989 = vunpack.c.0.s8 %v2988
        %v2990 = vlaneseq
        %v2991 = vshrl.u32 %v2990, 7
        %v2992 = vsub.s32 %v2989, %v2991
        %v2993 = vrot.slane %v2983, %v2992
        %v2995 = vunpack.c.l.s4 1966171168
        %v2996 = vunpack.c.0.s8 %v2995
        %v2997 = vlaneseq
        %v2998 = vshrl.u32 %v2997, 7
        %v2999 = vsub.s32 %v2996, %v2998
        %v3000 = vrot.slane %v2984, %v2999
        %v3002 = vunpack.c.l.s4 1966171168
        %v3003 = vunpack.c.0.s8 %v3002
        %v3004 = vlaneseq
        %v3005 = vshrl.u32 %v3004, 7
        %v3006 = vsub.s32 %v3003, %v3005
        %v3007 = vrot.slane %v2985, %v3006
        %v3009 = vunpack.c.l.s4 1966171168
        %v3010 = vunpack.c.0.s8 %v3009
        %v3011 = vlaneseq
        %v3012 = vshrl.u32 %v3011, 7
        %v3013 = vsub.s32 %v3010, %v3012
        %v3014 = vrot.slane %v2986, %v3013
        %v3015 = vcombine.low %v2993, %v3000
        %v3016 = vcombine.high %v2993, %v3000
        %v3017 = vcombine.low %v3007, %v3014
        %v3018 = vcombine.high %v3007, %v3014
        %v3020 = vunpack.c.l.s4 1966171168
        %v3021 = vunpack.c.0.s8 %v3020
        %v3022 = vlaneseq
        %v3023 = vshrl.u32 %v3022, 7
        %v3024 = vsub.s32 %v3021, %v3023
        %v3025 = vrot.slane %v3015, %v3024
        %v3027 = vunpack.c.l.s4 1966171168
        %v3028 = vunpack.c.0.s8 %v3027
        %v3029 = vlaneseq
        %v3030 = vshrl.u32 %v3029, 7
        %v3031 = vsub.s32 %v3028, %v3030
        %v3032 = vrot.slane %v3016, %v3031
        %v3034 = vunpack.c.l.s4 1966171168
        %v3035 = vunpack.c.0.s8 %v3034
        %v3036 = vlaneseq
        %v3037 = vshrl.u32 %v3036, 7
        %v3038 = vsub.s32 %v3035, %v3037
        %v3039 = vrot.slane %v3017, %v3038
        %v3041 = vunpack.c.l.s4 1966171168
        %v3042 = vunpack.c.0.s8 %v3041
        %v3043 = vlaneseq
        %v3044 = vshrl.u32 %v3043, 7
        %v3045 = vsub.s32 %v3042, %v3044
        %v3046 = vrot.slane %v3018, %v3045
        %v3047 = vcombine.low %v3025, %v3039
        %v3048 = vcombine.low %v3032, %v3046
        %s3051 = scalar_lea.vmem %s345, 2 [#allocation12]
        %3052 = vst [vmem:[%s3051] ss:$4 sm:$0xff] %v3047
        %s3053 = scalar_lea.vmem %s345, 34 [#allocation12]
        %3054 = vst [vmem:[%s3053] ss:$4 sm:$0xff] %v3048
        %s3055 = sand.u32 %s128, 1
        %s3056 = scalar_lea.sflag [#allocation4], %s3055
        %s3057 = sand.u32 %s128, 1
        %s3058 = smul.addr %s3057, 64
        %s3059 = scalar_lea.vmem [#allocation9], %s3058
        %s3060 = sand.u32 %s26, 1
        %s3061 = scalar_lea.sflag [#allocation11], %s3060
        %s3062 = sand.u32 %s154, 1
        %s3063 = smul.addr %s3062, 64
        %s3064 = scalar_lea.vmem [#allocation10], %s3063
        %s3065 = sand.u32 %s26, 1
        %s3066 = scalar_lea.sflag [#allocation11], %s3065
        %s3067 = sand.u32 %s180, 1
        %s3068 = smul.addr %s3067, 64
        %s3069 = scalar_lea.vmem [#allocation12], %s3068
        // Predicated region
        $region53: #{bfmf_batch_forward.1} parent=35 // pred_check
          %p3070 = pneg %p138
        $region54: #{bfmf_batch_forward.1} parent=35 // pred_check_branch
          %3072 = sbr.rel (%p3070) target = $region56
        $region55: #{bfmf_batch_forward.1} parent=35 // pred_region
          %s3073 = smul.u32 8, %s26
          %s3075 = ssub.s32 1024, 1024
          %3076 = vsyncadd %s3056, %s3075
          %s3077 = smul.addr %s3073, 64
          %s3078 = scalar_lea.hbm %s4, %s3077
          %s3079 = sshll.u32 %s3059, 4
          %s3080 = int_to_ptr.vmem [resolvable:$true] %s3079
          %3085 = dma.vmem_to_hbm [thread:$0]  %s3080, 1024, %s3078, %s3056, 512, 1024, 32
        $region56: #{bfmf_batch_forward.1} parent=35 // pred_fallthru
          _
        // Predicated region
        $region57: #{bfmf_batch_forward.1} parent=35 // pred_check
          %p3086 = pneg %p164
        $region58: #{bfmf_batch_forward.1} parent=35 // pred_check_branch
          %3088 = sbr.rel (%p3086) target = $region60
        $region59: #{bfmf_batch_forward.1} parent=35 // pred_region
          %s3089 = smul.u32 8, %s26
          %s3091 = ssub.s32 1024, 1024
          %3092 = vsyncadd %s3061, %s3091
          %s3093 = smul.addr %s3089, 64
          %s3094 = scalar_lea.hbm %s5, %s3093
          %s3095 = sshll.u32 %s3064, 4
          %s3096 = int_to_ptr.vmem [resolvable:$true] %s3095
          %3101 = dma.vmem_to_hbm [thread:$0]  %s3096, 1024, %s3094, %s3061, 512, 1024, 32
        $region60: #{bfmf_batch_forward.1} parent=35 // pred_fallthru
          _
        // Predicated region
        $region61: #{bfmf_batch_forward.1} parent=35 // pred_check
          %p3102 = pneg %p190
        $region62: #{bfmf_batch_forward.1} parent=35 // pred_check_branch
          %3104 = sbr.rel (%p3102) target = $region64
        $region63: #{bfmf_batch_forward.1} parent=35 // pred_region
          %s3105 = smul.u32 8, %s26
          %s3107 = ssub.s32 1024, 1024
          %3108 = vsyncadd %s3066, %s3107
          %s3109 = smul.addr %s3105, 64
          %s3110 = scalar_lea.hbm %s6, %s3109
          %s3111 = sshll.u32 %s3069, 4
          %s3112 = int_to_ptr.vmem [resolvable:$true] %s3111
          %3117 = dma.vmem_to_hbm [thread:$0]  %s3112, 1024, %s3110, %s3066, 512, 1024, 32
        $region64: #{bfmf_batch_forward.1} parent=35 // pred_fallthru
          _
      $region36: #{bfmf_batch_forward.1} parent=5 // pred_fallthru
        _
      %p3118 = scmp.le.s32.totalorder 2, %s21
      // Predicated region
      $region65: #{bfmf_batch_forward.1} parent=5 // pred_check
        %p3119 = pneg %p3118
      $region66: #{bfmf_batch_forward.1} parent=5 // pred_check_branch
        %3121 = sbr.rel (%p3119) target = $region68
      $region67: #{bfmf_batch_forward.1} parent=5 // pred_region
        %s3122 = ssub.s32 %s21, 2
        // Predicated region
        $region69: #{bfmf_batch_forward.1} parent=67 // pred_check
          %p3123 = pneg %p144
        $region70: #{bfmf_batch_forward.1} parent=67 // pred_check_branch
          %3125 = sbr.rel (%p3123) target = $region72
        $region71: #{bfmf_batch_forward.1} parent=67 // pred_region
          %s3126 = sand.u32 %s129, 1
          %s3127 = scalar_lea.sflag [#allocation4], %s3126
          %s3128 = sand.u32 %s129, 1
          %s3129 = smul.addr %s3128, 64
          %s3130 = scalar_lea.vmem [#allocation9], %s3129
          %3131 = dma.done %s3127, 1024
        $region72: #{bfmf_batch_forward.1} parent=67 // pred_fallthru
          _
        // Predicated region
        $region73: #{bfmf_batch_forward.1} parent=67 // pred_check
          %p3132 = pneg %p170
        $region74: #{bfmf_batch_forward.1} parent=67 // pred_check_branch
          %3134 = sbr.rel (%p3132) target = $region76
        $region75: #{bfmf_batch_forward.1} parent=67 // pred_region
          %s3135 = sand.u32 %s27, 1
          %s3136 = scalar_lea.sflag [#allocation11], %s3135
          %s3137 = sand.u32 %s155, 1
          %s3138 = smul.addr %s3137, 64
          %s3139 = scalar_lea.vmem [#allocation10], %s3138
          %3140 = dma.done %s3136, 1024
        $region76: #{bfmf_batch_forward.1} parent=67 // pred_fallthru
          _
        // Predicated region
        $region77: #{bfmf_batch_forward.1} parent=67 // pred_check
          %p3141 = pneg %p196
        $region78: #{bfmf_batch_forward.1} parent=67 // pred_check_branch
          %3143 = sbr.rel (%p3141) target = $region80
        $region79: #{bfmf_batch_forward.1} parent=67 // pred_region
          %s3144 = sand.u32 %s27, 1
          %s3145 = scalar_lea.sflag [#allocation11], %s3144
          %s3146 = sand.u32 %s181, 1
          %s3147 = smul.addr %s3146, 64
          %s3148 = scalar_lea.vmem [#allocation12], %s3147
          %3149 = dma.done %s3145, 1024
        $region80: #{bfmf_batch_forward.1} parent=67 // pred_fallthru
          _
      $region68: #{bfmf_batch_forward.1} parent=5 // pred_fallthru
        _
    $region6: #{bfmf_batch_forward.1} parent=1 // loop_footer
      %s25 = sadd.s32 1, %s21
    $region7: #{bfmf_batch_forward.1} parent=1 // loop_footer_branch
      %20 = sbr.rel target = $region3
    $region8: #{bfmf_batch_forward.1} parent=1 // loop_exit
      _
    %3150 = vsyncpa [#allocation3], 1
    %s3151 = scalar_lea.sflag [#allocation3], 1
    %3152 = vsyncpa %s3151, 1
    %3153 = vsyncpa [#allocation6], 1
    %3154 = vsyncpa [#allocation4], 1
    %s3155 = scalar_lea.sflag [#allocation4], 1
    %3156 = vsyncpa %s3155, 1
    %3157 = vsyncpa [#allocation11], 1
    %s3158 = scalar_lea.sflag [#allocation11], 1
    %3159 = vsyncpa %s3158, 1

</llo_original>
